<compile_context>
chip_gen: v7x
topology: tpu7x:2x2x1
jax: 0.10.0
libtpu: 0.0.40
codegen_flags: <defaults>
</compile_context>

<pallas_src>
import functools
import math

import jax
import jax.numpy as jnp
from jax import lax
from jax.experimental import pallas as pl
from jax.experimental.pallas import tpu as pltpu

_INV_SQRT2 = 1.0 / math.sqrt(2.0)
_SQRT_2_OVER_PI = math.sqrt(2.0 / math.pi)


def _round_up(x, m):
    return (x + m - 1) // m * m


def _gelu(h, approx):
    if approx:
        # tanh approximation -> transcendental lands on the EUP slot.
        return 0.5 * h * (1.0 + jnp.tanh(_SQRT_2_OVER_PI * (h + 0.044715 * h * h * h)))
    # Exact erf form -> matches nn.GELU() default.
    return 0.5 * h * (1.0 + lax.erf(h * _INV_SQRT2))


# ----------------------------------------------------------------------------
# Kernels
# ----------------------------------------------------------------------------

def _mlp_kernel_resident(x_ref, w1_ref, b1_ref, w2_ref, b2_ref, o_ref,
                         *, approx_gelu, precision):
    # Whole hidden dim resident: one pass per row tile.
    h = jnp.dot(x_ref[...], w1_ref[...],
                preferred_element_type=jnp.float32, precision=precision)
    h = _gelu(h + b1_ref[...], approx_gelu)
    out = jnp.dot(h.astype(w2_ref.dtype), w2_ref[...],
                  preferred_element_type=jnp.float32, precision=precision)
    o_ref[...] = (out + b2_ref[...]).astype(o_ref.dtype)


def _mlp_kernel_hchunk(x_ref, w1_ref, b1_ref, w2_ref, b2_ref, o_ref, acc_ref,
                       *, approx_gelu, precision):
    # Hidden dim chunked along the trailing "arbitrary" grid axis.
    hi = pl.program_id(1)

    @pl.when(hi == 0)
    def _():
        acc_ref[...] = jnp.zeros_like(acc_ref)

    h = jnp.dot(x_ref[...], w1_ref[...],
                preferred_element_type=jnp.float32, precision=precision)
    h = _gelu(h + b1_ref[...], approx_gelu)
    acc_ref[...] += jnp.dot(h.astype(w2_ref.dtype), w2_ref[...],
                            preferred_element_type=jnp.float32,
                            precision=precision)

    @pl.when(hi == pl.num_programs(1) - 1)
    def _():
        o_ref[...] = (acc_ref[...] + b2_ref[...]).astype(o_ref.dtype)


# ----------------------------------------------------------------------------
# Parameter preparation (hoist padding + dtype cast out of the per-call path)
# ----------------------------------------------------------------------------

def prepare_mlp_params(w1, b1, w2, b2, *, mxu_dtype=jnp.bfloat16):
    """Pad feature axes to multiples of 128 and cast MXU operands once.

    w1: (C_in, H), b1: (H,), w2: (H, C_out), b2: (C_out,)  (nn.Linear weights
    stored transposed as (in, out)).
    """
    C_in, H = w1.shape
    H2, C_out = w2.shape
    assert H2 == H, "fc1/fc2 hidden dims disagree"
    wdt = w1.dtype if mxu_dtype is None else mxu_dtype
    C_in_p = _round_up(C_in, 128)
    H_p = _round_up(H, 128)
    C_out_p = _round_up(C_out, 128)
    w1p = jnp.pad(w1.astype(wdt), ((0, C_in_p - C_in), (0, H_p - H)))
    b1p = jnp.pad(b1.astype(jnp.float32), (0, H_p - H)).reshape(1, H_p)
    w2p = jnp.pad(w2.astype(wdt), ((0, H_p - H), (0, C_out_p - C_out)))
    b2p = jnp.pad(b2.astype(jnp.float32), (0, C_out_p - C_out)).reshape(1, C_out_p)
    return dict(w1p=w1p, b1p=b1p, w2p=w2p, b2p=b2p,
                C_in=C_in, H=H, C_out=C_out, mxu_dtype=mxu_dtype)


# ----------------------------------------------------------------------------
# VMEM budget (generation-aware) and tile selection
# ----------------------------------------------------------------------------

def _vmem_budget_bytes():
    try:
        kind = jax.devices()[0].device_kind.lower()
    except Exception:  # pragma: no cover - defensive; default below is safe.
        kind = ""
    if "v5e" in kind or "v5 lite" in kind or "v5lite" in kind:
        budget = 14 << 20      # stay near v5e's 16 MiB scoped default
    elif "v7" in kind:
        budget = 40 << 20      # v7x: only 64 MiB physical VMEM per TensorCore
    elif "v6" in kind:
        budget = 64 << 20      # v6e: 128 MiB physical, raise the scoped limit
    else:
        budget = 28 << 20      # unknown: safe under a 32 MiB scoped default
    try:
        phys = int(pltpu.get_tpu_info().vmem_capacity_bytes)
        budget = min(budget, max(12 << 20, phys - (16 << 20)))
    except Exception:
        pass                   # keep the device-kind-derived budget
    return budget


def _pick_tiles(M, C_in_p, H_p, C_out_p, x_itm, w_itm, out_itm, budget,
                tm_target, tm_override, th_override):
    """Pick (row tile tm, hidden chunk th) so the VMEM footprint fits budget."""
    sub = 16 if min(x_itm, w_itm, out_itm) < 4 else 8   # sublane quantum
    m_cap = _round_up(max(M, 1), sub)

    def footprint(tm, th):
        dbl = 2  # default double-buffering on every BlockSpec
        io = (dbl * tm * C_in_p * x_itm          # x tile
              + dbl * C_in_p * th * w_itm        # w1 chunk
              + dbl * th * 4                     # b1 chunk (f32)
              + dbl * th * C_out_p * w_itm       # w2 chunk
              + dbl * C_out_p * 4                # b2 (f32)
              + dbl * tm * C_out_p * out_itm)    # output tile
        scratch = tm * C_out_p * 4               # f32 accumulator (chunked path)
        temps = (tm * th * 4                     # f32 hidden chunk
                 + tm * th * w_itm               # cast copy for the 2nd matmul
                 + tm * C_out_p * 4              # f32 matmul result
                 + tm * C_out_p * out_itm)       # output-dtype cast temp
        headroom = 2 << 20                       # Mosaic-internal scratch etc.
        return io + scratch + temps + headroom

    if th_override is not None:
        if th_override % 128 or H_p % th_override:
            raise ValueError("th must be a multiple of 128 that divides padded H")
        th_cands = [th_override]
    else:
        th_cands = [H_p] + [c for c in (8192, 4096, 2048, 1024, 512, 256, 128)
                            if c < H_p and H_p % c == 0]

    if tm_override is not None:
        tm_cands = [max(sub, _round_up(tm_override, sub))]
    else:
        base = (tm_target, 384, 256, 192, 128, 64, 32, 16, 8)
        tm_cands = sorted({max(sub, min(m_cap, (c // sub) * sub)) for c in base},
                          reverse=True)

    # Pass 1: full hidden residency with a large row tile (no weight re-stream).
    for tm in tm_cands:
        if tm < 256:
            break
        if footprint(tm, th_cands[0]) <= budget:
            return tm, th_cands[0]
    # Pass 2: keep a large row tile, chunk the hidden dim (streamed weights).
    for tm in tm_cands:
        if tm < 256:
            break
        for th in th_cands:
            if footprint(tm, th) <= budget:
                return tm, th
    # Pass 3: anything that fits (small problems / tiny budgets).
    for tm in tm_cands:
        for th in th_cands:
            if footprint(tm, th) <= budget:
                return tm, th
    # Last resort: smallest candidates (may still exceed budget, but bounded).
    return tm_cands[-1], th_cands[-1]


# ----------------------------------------------------------------------------
# Public wrapper
# ----------------------------------------------------------------------------

def mlp_pallas(x, w1=None, b1=None, w2=None, b2=None, *, params=None,
               mxu_dtype=jnp.bfloat16, tm=None, th=None, tm_target=512,
               approx_gelu=False, row_core_parallel=False):
    """Fused MLP: fc1 -> GELU -> (dropout p=0) -> fc2 -> (dropout p=0).

    x: (..., C_in).  Either pass raw (w1, b1, w2, b2) or a pre-prepared
    `params` from prepare_mlp_params() (recommended for repeated calls).
    mxu_dtype: dtype for the MXU operands (default bf16; biases/GELU/acc stay
    f32).  Pass None for a full-f32 path (uses precision=HIGHEST).
    """
    if params is None:
        params = prepare_mlp_params(w1, b1, w2, b2, mxu_dtype=mxu_dtype)
    w1p, b1p, w2p, b2p = params["w1p"], params["b1p"], params["w2p"], params["b2p"]
    C_in, C_out = params["C_in"], params["C_out"]
    mxu_dtype = params["mxu_dtype"]

    if x.shape[-1] != C_in:
        raise ValueError(f"x last dim {x.shape[-1]} != in_features {C_in}")

    out_dtype = x.dtype
    lead = x.shape[:-1]
    M = int(math.prod(lead)) if lead else 1

    C_in_p, H_p = w1p.shape
    C_out_p = w2p.shape[1]

    x_mxu = x if mxu_dtype is None else x.astype(mxu_dtype)
    x_itm = jnp.dtype(x_mxu.dtype).itemsize
    w_itm = jnp.dtype(w1p.dtype).itemsize
    out_itm = jnp.dtype(out_dtype).itemsize

    budget = _vmem_budget_bytes()
    tm_sel, th_sel = _pick_tiles(M, C_in_p, H_p, C_out_p, x_itm, w_itm, out_itm,
                                 budget, tm_target, tm, th)

    M_p = _round_up(max(M, 1), tm_sel)
    x2d = jnp.pad(x_mxu.reshape(M, C_in), ((0, M_p - M), (0, C_in_p - C_in)))

    n_rows = M_p // tm_sel
    nh = H_p // th_sel

    # f32 path gets precision=HIGHEST (fp32 fidelity to nn.Linear); bf16 path
    # uses the native bf16 MXU rate with f32 accumulation.
    precision = (lax.Precision.HIGHEST
                 if (mxu_dtype is None and x.dtype == jnp.float32)
                 else lax.Precision.DEFAULT)

    row_sem = pltpu.CORE_PARALLEL if row_core_parallel else pltpu.PARALLEL

    if nh == 1:
        kernel = functools.partial(_mlp_kernel_resident,
                                   approx_gelu=approx_gelu, precision=precision)
        grid = (n_rows,)
        in_specs = [
            pl.BlockSpec((tm_sel, C_in_p), lambda i: (i, 0)),
            pl.BlockSpec((C_in_p, H_p), lambda i: (0, 0)),
            pl.BlockSpec((1, H_p), lambda i: (0, 0)),
            pl.BlockSpec((H_p, C_out_p), lambda i: (0, 0)),
            pl.BlockSpec((1, C_out_p), lambda i: (0, 0)),
        ]
        out_specs = pl.BlockSpec((tm_sel, C_out_p), lambda i: (i, 0))
        scratch_shapes = []
        dim_sem = (row_sem,)
    else:
        kernel = functools.partial(_mlp_kernel_hchunk,
                                   approx_gelu=approx_gelu, precision=precision)
        grid = (n_rows, nh)  # reduction (H) axis last
        in_specs = [
            pl.BlockSpec((tm_sel, C_in_p), lambda i, h: (i, 0)),
            pl.BlockSpec((C_in_p, th_sel), lambda i, h: (0, h)),
            pl.BlockSpec((1, th_sel), lambda i, h: (0, h)),
            pl.BlockSpec((th_sel, C_out_p), lambda i, h: (h, 0)),
            pl.BlockSpec((1, C_out_p), lambda i, h: (0, 0)),
        ]
        out_specs = pl.BlockSpec((tm_sel, C_out_p), lambda i, h: (i, 0))
        scratch_shapes = [pltpu.VMEM((tm_sel, C_out_p), jnp.float32)]
        dim_sem = (row_sem, pltpu.ARBITRARY)

    vmem_limit = int(min(100 << 20, max(32 << 20, budget + (16 << 20))))

    out2d = pl.pallas_call(
        kernel,
        out_shape=jax.ShapeDtypeStruct((M_p, C_out_p), out_dtype),
        grid_spec=pltpu.PrefetchScalarGridSpec(
            num_scalar_prefetch=0,
            grid=grid,
            in_specs=in_specs,
            out_specs=out_specs,
            scratch_shapes=scratch_shapes,
        ),
        compiler_params=pltpu.CompilerParams(
            dimension_semantics=dim_sem,
            vmem_limit_bytes=vmem_limit,
        ),
    )(x2d, w1p, b1p, w2p, b2p)

    return out2d[:M, :C_out].reshape(lead + (C_out,))


# ----------------------------------------------------------------------------
# Pure-JAX reference and self-test
# ----------------------------------------------------------------------------

def mlp_reference(x, w1, b1, w2, b2, approx_gelu=False):
    hp = lax.Precision.HIGHEST
    h = jnp.einsum("...c,ch->...h", x, w1, precision=hp) + b1
    h = _gelu(h, approx_gelu)
    return jnp.einsum("...h,ho->...o", h, w2, precision=hp) + b2


def _make_inputs(key, B, N, C_in, H, C_out):
    kx, kw1, kb1, kw2, kb2 = jax.random.split(key, 5)
    x = jax.random.normal(kx, (B, N, C_in), dtype=jnp.float32)
    bound1 = 1.0 / math.sqrt(C_in)
    w1 = jax.random.uniform(kw1, (C_in, H), jnp.float32, -bound1, bound1)
    b1 = jax.random.uniform(kb1, (H,), jnp.float32, -bound1, bound1)
    bound2 = 1.0 / math.sqrt(H)
    w2 = jax.random.uniform(kw2, (H, C_out), jnp.float32, -bound2, bound2)
    b2 = jax.random.uniform(kb2, (C_out,), jnp.float32, -bound2, bound2)
    return x, w1, b1, w2, b2


if __name__ == "__main__":
    key = jax.random.PRNGKey(0)
    k1, k2, k3 = jax.random.split(key, 3)

    # Case 1: small module-consistent shapes, exact f32 path (resident kernel).
    B, N, C_in, H, C_out = 2, 8, 16, 32, 16
    x, w1, b1, w2, b2 = _make_inputs(k1, B, N, C_in, H, C_out)
    out = jax.block_until_ready(mlp_pallas(x, w1, b1, w2, b2, mxu_dtype=None))
    ref = mlp_reference(x, w1, b1, w2, b2)
    assert out.shape == (B, N, C_out)
    assert jnp.allclose(out, ref, atol=1e-3, rtol=1e-3), "case1 mismatch"

    # Case 2: ragged token count + non-multiple-of-128 features, default bf16
    # MXU path with pre-prepared (padded/cast-once) params.
    B, N, C_in, H, C_out = 2, 131, 48, 96, 40
    x, w1, b1, w2, b2 = _make_inputs(k2, B, N, C_in, H, C_out)
    prepared = prepare_mlp_params(w1, b1, w2, b2)          # bf16 default
    out = jax.block_until_ready(mlp_pallas(x, params=prepared))
    ref = mlp_reference(x, w1, b1, w2, b2)
    assert out.shape == (B, N, C_out)
    assert jnp.allclose(out, ref, atol=3e-2, rtol=3e-2), "case2 mismatch"

    # Case 3: forced hidden-dim chunking (th=128, 2 chunks) exercising the
    # accumulating kernel, exact f32 path.
    B, N, C_in, H, C_out = 2, 32, 64, 256, 64
    x, w1, b1, w2, b2 = _make_inputs(k3, B, N, C_in, H, C_out)
    out = jax.block_until_ready(
        mlp_pallas(x, w1, b1, w2, b2, mxu_dtype=None, th=128))
    ref = mlp_reference(x, w1, b1, w2, b2)
    assert out.shape == (B, N, C_out)
    assert jnp.allclose(out, ref, atol=1e-3, rtol=1e-3), "case3 mismatch"

    print("KERNEL_OK")
</pallas_src>

<mosaic_0001>
module attributes {stable_mosaic.version = 11 : i64} {
  func.func @_mlp_kernel_resident(%arg0: i32, %arg1: memref<16x128xf32, #tpu.memory_space<vmem>>, %arg2: memref<128x128xf32, #tpu.memory_space<vmem>>, %arg3: memref<1x128xf32, #tpu.memory_space<vmem>>, %arg4: memref<128x128xf32, #tpu.memory_space<vmem>>, %arg5: memref<1x128xf32, #tpu.memory_space<vmem>>, %arg6: memref<16x128xf32, #tpu.memory_space<vmem>>) attributes {dimension_semantics = [#tpu.dimension_semantics<parallel>], iteration_bounds = array<i64: 1>, scalar_prefetch = 0 : i64, scratch_operands = 0 : i64, tpu.core_type = #tpu.core_type<tc>, window_params = [{transform_indices = @transform_0, window_bounds = array<i64: 16, 128>}, {pipeline_mode = #tpu.pipeline_mode<synchronous>, transform_indices = @transform_1, window_bounds = array<i64: 128, 128>}, {pipeline_mode = #tpu.pipeline_mode<synchronous>, transform_indices = @transform_2, window_bounds = array<i64: 1, 128>}, {pipeline_mode = #tpu.pipeline_mode<synchronous>, transform_indices = @transform_3, window_bounds = array<i64: 128, 128>}, {pipeline_mode = #tpu.pipeline_mode<synchronous>, transform_indices = @transform_4, window_bounds = array<i64: 1, 128>}, {transform_indices = @transform_5, window_bounds = array<i64: 16, 128>}]} {
    %c0 = arith.constant 0 : index
    %c0_0 = arith.constant 0 : index
    %0 = vector.load %arg1[%c0, %c0_0] : memref<16x128xf32, #tpu.memory_space<vmem>>, vector<16x128xf32>
    %c0_1 = arith.constant 0 : index
    %c0_2 = arith.constant 0 : index
    %1 = vector.load %arg2[%c0_1, %c0_2] : memref<128x128xf32, #tpu.memory_space<vmem>>, vector<128x128xf32>
    %cst = arith.constant dense<0.000000e+00> : vector<16x128xf32>
    %2 = tpu.matmul %0, %1, %cst {dimension_numbers = #tpu.dot_dimension_numbers<[1], [0], [0], [1], [0, 0, 1, 1], [], []>, precision = #tpu.contract_precision<fp32>} : vector<16x128xf32>, vector<128x128xf32>, vector<16x128xf32> -> vector<16x128xf32>
    %c0_3 = arith.constant 0 : index
    %c0_4 = arith.constant 0 : index
    %3 = vector.load %arg3[%c0_3, %c0_4] : memref<1x128xf32, #tpu.memory_space<vmem>>, vector<1x128xf32>
    %4 = vector.broadcast %3 : vector<1x128xf32> to vector<16x128xf32>
    %5 = arith.addf %2, %4 : vector<16x128xf32>
    %cst_5 = arith.constant 5.000000e-01 : f32
    %6 = vector.broadcast %cst_5 : f32 to vector<16x128xf32>
    %7 = arith.mulf %6, %5 : vector<16x128xf32>
    %cst_6 = arith.constant 0.707106769 : f32
    %8 = vector.broadcast %cst_6 : f32 to vector<16x128xf32>
    %9 = arith.mulf %5, %8 : vector<16x128xf32>
    %10 = math.erf %9 : vector<16x128xf32>
    %cst_7 = arith.constant 1.000000e+00 : f32
    %11 = vector.broadcast %cst_7 : f32 to vector<16x128xf32>
    %12 = arith.addf %11, %10 : vector<16x128xf32>
    %13 = arith.mulf %7, %12 : vector<16x128xf32>
    %c0_8 = arith.constant 0 : index
    %c0_9 = arith.constant 0 : index
    %14 = vector.load %arg4[%c0_8, %c0_9] : memref<128x128xf32, #tpu.memory_space<vmem>>, vector<128x128xf32>
    %cst_10 = arith.constant dense<0.000000e+00> : vector<16x128xf32>
    %15 = tpu.matmul %13, %14, %cst_10 {dimension_numbers = #tpu.dot_dimension_numbers<[1], [0], [0], [1], [0, 0, 1, 1], [], []>, precision = #tpu.contract_precision<fp32>} : vector<16x128xf32>, vector<128x128xf32>, vector<16x128xf32> -> vector<16x128xf32>
    %c0_11 = arith.constant 0 : index
    %c0_12 = arith.constant 0 : index
    %16 = vector.load %arg5[%c0_11, %c0_12] : memref<1x128xf32, #tpu.memory_space<vmem>>, vector<1x128xf32>
    %17 = vector.broadcast %16 : vector<1x128xf32> to vector<16x128xf32>
    %18 = arith.addf %15, %17 : vector<16x128xf32>
    %c0_13 = arith.constant 0 : index
    %c0_14 = arith.constant 0 : index
    %19 = vector.load %arg6[%c0_13, %c0_14] : memref<16x128xf32, #tpu.memory_space<vmem>>, vector<16x128xf32>
    tpu.vector_store %arg6[%c0_13, %c0_14], %18 {strides = array<i32>} : memref<16x128xf32, #tpu.memory_space<vmem>>, vector<16x128xf32>,
    return
  }
  func.func @transform_0(%arg0: i32) -> (i32, i32) {
    %c0_i32 = arith.constant 0 : i32
    %c0_i32_0 = arith.constant 0 : i32
    return %arg0, %c0_i32 : i32, i32
  }
  func.func @transform_1(%arg0: i32) -> (i32, i32) {
    %c0_i32 = arith.constant 0 : i32
    %c0_i32_0 = arith.constant 0 : i32
    %c0_i32_1 = arith.constant 0 : i32
    return %c0_i32, %c0_i32_0 : i32, i32
  }
  func.func @transform_2(%arg0: i32) -> (i32, i32) {
    %c0_i32 = arith.constant 0 : i32
    %c0_i32_0 = arith.constant 0 : i32
    %c0_i32_1 = arith.constant 0 : i32
    return %c0_i32, %c0_i32_0 : i32, i32
  }
  func.func @transform_3(%arg0: i32) -> (i32, i32) {
    %c0_i32 = arith.constant 0 : i32
    %c0_i32_0 = arith.constant 0 : i32
    %c0_i32_1 = arith.constant 0 : i32
    return %c0_i32, %c0_i32_0 : i32, i32
  }
  func.func @transform_4(%arg0: i32) -> (i32, i32) {
    %c0_i32 = arith.constant 0 : i32
    %c0_i32_0 = arith.constant 0 : i32
    %c0_i32_1 = arith.constant 0 : i32
    return %c0_i32, %c0_i32_0 : i32, i32
  }
  func.func @transform_5(%arg0: i32) -> (i32, i32) {
    %c0_i32 = arith.constant 0 : i32
    %c0_i32_0 = arith.constant 0 : i32
    return %arg0, %c0_i32 : i32, i32
  }
}

</mosaic_0001>

<llo_original>
// kernel: tpu_custom_call.1
$region0: #{tpu_custom_call.1}
  #allocation0 [shape = 'u32[]', space=smem, size = 0x4, offset = 0x4, fixed_abs, tag = 'smem constant byte address 0x4 - core index']
  #allocation1 [shape = 'u32[144,128]{1,0:T(1,128)}', space=vmem, size = 0x12000, scoped, tag = 'internal scratch']
  %s0 = inlined_call_operand.hbm [shape: f32[16,128], index: 0, kind: input, shape index: {}]
  %s1 = inlined_call_operand.hbm [shape: f32[128,128], index: 1, kind: input, shape index: {}]
  %s2 = inlined_call_operand.vmem [shape: f32[1,128], index: 2, kind: input, shape index: {}]
  %s3 = inlined_call_operand.hbm [shape: f32[128,128], index: 3, kind: input, shape index: {}]
  %s4 = inlined_call_operand.vmem [shape: f32[1,128], index: 4, kind: input, shape index: {}]
  %s5 = inlined_call_operand.hbm [shape: f32[16,128], index: 5, kind: output, shape index: {}]
  %s6 = sld [smem:[#allocation0]]
  $region42: #{tpu_custom_call.1} parent=0
    _
  %s8 = ssub.s32 1, %s6
  %s9 = scalar_select 0, %s8, %s6
  $region1: #{tpu_custom_call.1} parent=0
    #allocation2 [shape = 'u8[8192]{0}', space=vmem, size = 0x2000, scoped, tag = 'input window, operand 0, single buffered']
    #allocation3 [shape = 's32[1]{0}', space=sflag, size = 0x4, scoped, tag = 'scoped memory for tpu_custom_call.1']
    #allocation4 [shape = 's32[1]{0}', space=sflag, size = 0x4, scoped, tag = 'scoped memory for tpu_custom_call.1']
    #allocation5 [shape = 'u8[65536]{0}', space=vmem, size = 0x10000, scoped, tag = 'input window, operand 1, single buffered']
    #allocation6 [shape = 's32[1]{0}', space=sflag, size = 0x4, scoped, tag = 'scoped memory for tpu_custom_call.1']
    #allocation7 [shape = 'u8[65536]{0}', space=vmem, size = 0x10000, scoped, tag = 'input window, operand 3, single buffered']
    #allocation8 [shape = 'u8[8192]{0}', space=vmem, size = 0x2000, scoped, tag = 'output window, operand 0, single buffered']
    %10 = vsyncpa [#allocation3], 0
    %11 = vsyncpa [#allocation6], 0
    %12 = vsyncpa [#allocation4], 0
    // Predicated region
    $region2: #{tpu_custom_call.1} parent=1 // pred_check
      _
    $region3: #{tpu_custom_call.1} parent=1 // pred_check_branch
      %14 = sbr.rel (0) target = $region5
    $region4: #{tpu_custom_call.1} parent=1 // pred_region
      %s16 = ssub.s32 256, 256
      %17 = vsyncadd [#allocation3], %s16
      %s18 = sshll.u32 [#allocation2], 4
      %s19 = int_to_ptr.vmem [resolvable:$true] %s18
      %24 = dma.hbm_to_vmem [thread:$0]  %s0, 256, %s19, [#allocation3], 128, 128, 8
    $region5: #{tpu_custom_call.1} parent=1 // pred_fallthru
      _
    // Predicated region
    $region6: #{tpu_custom_call.1} parent=1 // pred_check
      _
    $region7: #{tpu_custom_call.1} parent=1 // pred_check_branch
      %26 = sbr.rel (0) target = $region9
    $region8: #{tpu_custom_call.1} parent=1 // pred_region
      %s28 = ssub.s32 2048, 2048
      %29 = vsyncadd [#allocation6], %s28
      %s30 = sshll.u32 [#allocation5], 4
      %s31 = int_to_ptr.vmem [resolvable:$true] %s30
      %36 = dma.hbm_to_vmem [thread:$0]  %s1, 2048, %s31, [#allocation6], 128, 128, 8
    $region9: #{tpu_custom_call.1} parent=1 // pred_fallthru
      _
    // Predicated region
    $region10: #{tpu_custom_call.1} parent=1 // pred_check
      _
    $region11: #{tpu_custom_call.1} parent=1 // pred_check_branch
      %38 = sbr.rel (0) target = $region13
    $region12: #{tpu_custom_call.1} parent=1 // pred_region
      _
    $region13: #{tpu_custom_call.1} parent=1 // pred_fallthru
      _
    // Predicated region
    $region14: #{tpu_custom_call.1} parent=1 // pred_check
      _
    $region15: #{tpu_custom_call.1} parent=1 // pred_check_branch
      %40 = sbr.rel (0) target = $region17
    $region16: #{tpu_custom_call.1} parent=1 // pred_region
      %s42 = ssub.s32 2048, 2048
      %43 = vsyncadd [#allocation6], %s42
      %s44 = sshll.u32 [#allocation7], 4
      %s45 = int_to_ptr.vmem [resolvable:$true] %s44
      %50 = dma.hbm_to_vmem [thread:$0]  %s3, 2048, %s45, [#allocation6], 128, 128, 8
    $region17: #{tpu_custom_call.1} parent=1 // pred_fallthru
      _
    // Predicated region
    $region18: #{tpu_custom_call.1} parent=1 // pred_check
      _
    $region19: #{tpu_custom_call.1} parent=1 // pred_check_branch
      %52 = sbr.rel (0) target = $region21
    $region20: #{tpu_custom_call.1} parent=1 // pred_region
      _
    $region21: #{tpu_custom_call.1} parent=1 // pred_fallthru
      _
    // Predicated region
    $region22: #{tpu_custom_call.1} parent=1 // pred_check
      _
    $region23: #{tpu_custom_call.1} parent=1 // pred_check_branch
      %54 = sbr.rel (0) target = $region25
    $region24: #{tpu_custom_call.1} parent=1 // pred_region
      %55 = dma.done [#allocation3], 256
    $region25: #{tpu_custom_call.1} parent=1 // pred_fallthru
      _
    // Predicated region
    $region26: #{tpu_custom_call.1} parent=1 // pred_check
      _
    $region27: #{tpu_custom_call.1} parent=1 // pred_check_branch
      %57 = sbr.rel (0) target = $region29
    $region28: #{tpu_custom_call.1} parent=1 // pred_region
      %58 = dma.done [#allocation6], 2048
    $region29: #{tpu_custom_call.1} parent=1 // pred_fallthru
      _
    // Predicated region
    $region30: #{tpu_custom_call.1} parent=1 // pred_check
      _
    $region31: #{tpu_custom_call.1} parent=1 // pred_check_branch
      %60 = sbr.rel (0) target = $region33
    $region32: #{tpu_custom_call.1} parent=1 // pred_region
      %61 = dma.done [#allocation6], 2048
    $region33: #{tpu_custom_call.1} parent=1 // pred_fallthru
      _
    %v62 = vld [vmem:[#allocation2] sm:$0xff]
    %v63 = vld [vmem:[#allocation2 + $0x8] sm:$0xff]
    %v64 = vld [vmem:[#allocation5] sm:$0xff]
    %v65 = vld [vmem:[#allocation5 + $0x8] sm:$0xff]
    %v66 = vld [vmem:[#allocation5 + $0x10] sm:$0xff]
    %v67 = vld [vmem:[#allocation5 + $0x18] sm:$0xff]
    %v68 = vld [vmem:[#allocation5 + $0x20] sm:$0xff]
    %v69 = vld [vmem:[#allocation5 + $0x28] sm:$0xff]
    %v70 = vld [vmem:[#allocation5 + $0x30] sm:$0xff]
    %v71 = vld [vmem:[#allocation5 + $0x38] sm:$0xff]
    %v72 = vld [vmem:[#allocation5 + $0x40] sm:$0xff]
    %v73 = vld [vmem:[#allocation5 + $0x48] sm:$0xff]
    %v74 = vld [vmem:[#allocation5 + $0x50] sm:$0xff]
    %v75 = vld [vmem:[#allocation5 + $0x58] sm:$0xff]
    %v76 = vld [vmem:[#allocation5 + $0x60] sm:$0xff]
    %v77 = vld [vmem:[#allocation5 + $0x68] sm:$0xff]
    %v78 = vld [vmem:[#allocation5 + $0x70] sm:$0xff]
    %v79 = vld [vmem:[#allocation5 + $0x78] sm:$0xff]
    %v80 = vld [vmem:[%s2] sm:$0x1]
    %v82 = vlaneseq
    %v83 = vshrl.u32 %v82, 7
    %v84 = vsub.s32 0, %v83
    %v85 = vrot.slane %v80, %v84
    %87 = vmatprep.subr.mxu0 0.0
    %v88 = vand.u32 %v64, 4294901760
    %89 = vmatpush1.msra.mxu0 %v88
    %90 = vmatprep.subr.mxu0 0.0
    %v91 = vand.u32 %v65, 4294901760
    %92 = vmatpush1.msra.mxu0 %v91
    %93 = vmatprep.subr.mxu0 0.0
    %v94 = vand.u32 %v66, 4294901760
    %95 = vmatpush1.msra.mxu0 %v94
    %96 = vmatprep.subr.mxu0 0.0
    %v97 = vand.u32 %v67, 4294901760
    %98 = vmatpush1.msra.mxu0 %v97
    %99 = vmatprep.subr.mxu0 0.0
    %v100 = vand.u32 %v68, 4294901760
    %101 = vmatpush1.msra.mxu0 %v100
    %102 = vmatprep.subr.mxu0 0.0
    %v103 = vand.u32 %v69, 4294901760
    %104 = vmatpush1.msra.mxu0 %v103
    %105 = vmatprep.subr.mxu0 0.0
    %v106 = vand.u32 %v70, 4294901760
    %107 = vmatpush1.msra.mxu0 %v106
    %108 = vmatprep.subr.mxu0 0.0
    %v109 = vand.u32 %v71, 4294901760
    %110 = vmatpush1.msra.mxu0 %v109
    %111 = vmatprep.subr.mxu0 0.0
    %v112 = vand.u32 %v72, 4294901760
    %113 = vmatpush1.msra.mxu0 %v112
    %114 = vmatprep.subr.mxu0 0.0
    %v115 = vand.u32 %v73, 4294901760
    %116 = vmatpush1.msra.mxu0 %v115
    %117 = vmatprep.subr.mxu0 0.0
    %v118 = vand.u32 %v74, 4294901760
    %119 = vmatpush1.msra.mxu0 %v118
    %120 = vmatprep.subr.mxu0 0.0
    %v121 = vand.u32 %v75, 4294901760
    %122 = vmatpush1.msra.mxu0 %v121
    %123 = vmatprep.subr.mxu0 0.0
    %v124 = vand.u32 %v76, 4294901760
    %125 = vmatpush1.msra.mxu0 %v124
    %126 = vmatprep.subr.mxu0 0.0
    %v127 = vand.u32 %v77, 4294901760
    %128 = vmatpush1.msra.mxu0 %v127
    %129 = vmatprep.subr.mxu0 0.0
    %v130 = vand.u32 %v78, 4294901760
    %131 = vmatpush1.msra.mxu0 %v130
    %132 = vmatprep.subr.mxu0 0.0
    %v133 = vand.u32 %v79, 4294901760
    %134 = vmatpush1.msra.mxu0 %v133
    %135 = vmatprep.subr.mxu0 0.0
    %136 = vmatpush1.msra.mxu0 0.0
    %137 = vmatprep.subr.mxu0 0.0
    %138 = vmatpush1.msra.mxu0 0.0
    %139 = vmatprep.subr.mxu0 0.0
    %140 = vmatpush1.msra.mxu0 0.0
    %141 = vmatprep.subr.mxu0 0.0
    %142 = vmatpush1.msra.mxu0 0.0
    %143 = vmatprep.subr.mxu0 0.0
    %144 = vmatpush1.msra.mxu0 0.0
    %145 = vmatprep.subr.mxu0 0.0
    %146 = vmatpush1.msra.mxu0 0.0
    %147 = vmatprep.subr.mxu0 0.0
    %148 = vmatpush1.msra.mxu0 0.0
    %149 = vmatprep.subr.mxu0 0.0
    %150 = vmatpush1.msra.mxu0 0.0
    %151 = vmatprep.subr.mxu0 0.0
    %152 = vmatpush1.msra.mxu0 0.0
    %153 = vmatprep.subr.mxu0 0.0
    %154 = vmatpush1.msra.mxu0 0.0
    %155 = vmatprep.subr.mxu0 0.0
    %156 = vmatpush1.msra.mxu0 0.0
    %157 = vmatprep.subr.mxu0 0.0
    %158 = vmatpush1.msra.mxu0 0.0
    %159 = vmatprep.subr.mxu0 0.0
    %160 = vmatpush1.msra.mxu0 0.0
    %161 = vmatprep.subr.mxu0 0.0
    %162 = vmatpush1.msra.mxu0 0.0
    %163 = vmatprep.subr.mxu0 0.0
    %164 = vmatpush1.msra.mxu0 0.0
    %165 = vmatprep.subr.mxu0 0.0
    %166 = vmatpush1.msra.mxu0 0.0
    %167 = vmatprep.mubr.f32.mxu0 0.0
    %v168 = vand.u32 %v62, 4294901760
    %v169 = vsub.f32 %v62, %v168
    %v170 = vand.u32 %v169, 4294901760
    %v171 = vsub.f32 %v169, %v170
    %v172 = vand.u32 %v171, 4294901760
    %173 = vmatmul.mubr.f32.gmra.mrb[0].mxu0 %v172
    %v174 = vpop.f32.mrb[0].mxu0
    %v175 = vadd.f32 %v85, %v174
    %v176 = vpop.f32.mrb[0].mxu0
    %177 = vmatprep.mubr.f32.mxu0 0.0
    %v178 = vand.u32 %v63, 4294901760
    %v179 = vsub.f32 %v63, %v178
    %v180 = vand.u32 %v179, 4294901760
    %v181 = vsub.f32 %v179, %v180
    %v182 = vand.u32 %v181, 4294901760
    %183 = vmatmul.mubr.f32.gmra.mrb[0].mxu0 %v182
    %v184 = vpop.f32.mrb[0].mxu0
    %v185 = vadd.f32 %v85, %v184
    %v186 = vpop.f32.mrb[0].mxu0
    %187 = vdwg.mxu0
    %188 = vmatprep.subr.mxu0 0.0
    %v189 = vand.u32 %v64, 4294901760
    %v190 = vsub.f32 %v64, %v189
    %v191 = vand.u32 %v190, 4294901760
    %v192 = vsub.f32 %v190, %v191
    %v193 = vand.u32 %v192, 4294901760
    %194 = vmatpush1.msra.mxu0 %v193
    %195 = vmatprep.subr.mxu0 0.0
    %v196 = vand.u32 %v65, 4294901760
    %v197 = vsub.f32 %v65, %v196
    %v198 = vand.u32 %v197, 4294901760
    %v199 = vsub.f32 %v197, %v198
    %v200 = vand.u32 %v199, 4294901760
    %201 = vmatpush1.msra.mxu0 %v200
    %202 = vmatprep.subr.mxu0 0.0
    %v203 = vand.u32 %v66, 4294901760
    %v204 = vsub.f32 %v66, %v203
    %v205 = vand.u32 %v204, 4294901760
    %v206 = vsub.f32 %v204, %v205
    %v207 = vand.u32 %v206, 4294901760
    %208 = vmatpush1.msra.mxu0 %v207
    %209 = vmatprep.subr.mxu0 0.0
    %v210 = vand.u32 %v67, 4294901760
    %v211 = vsub.f32 %v67, %v210
    %v212 = vand.u32 %v211, 4294901760
    %v213 = vsub.f32 %v211, %v212
    %v214 = vand.u32 %v213, 4294901760
    %215 = vmatpush1.msra.mxu0 %v214
    %216 = vmatprep.subr.mxu0 0.0
    %v217 = vand.u32 %v68, 4294901760
    %v218 = vsub.f32 %v68, %v217
    %v219 = vand.u32 %v218, 4294901760
    %v220 = vsub.f32 %v218, %v219
    %v221 = vand.u32 %v220, 4294901760
    %222 = vmatpush1.msra.mxu0 %v221
    %223 = vmatprep.subr.mxu0 0.0
    %v224 = vand.u32 %v69, 4294901760
    %v225 = vsub.f32 %v69, %v224
    %v226 = vand.u32 %v225, 4294901760
    %v227 = vsub.f32 %v225, %v226
    %v228 = vand.u32 %v227, 4294901760
    %229 = vmatpush1.msra.mxu0 %v228
    %230 = vmatprep.subr.mxu0 0.0
    %v231 = vand.u32 %v70, 4294901760
    %v232 = vsub.f32 %v70, %v231
    %v233 = vand.u32 %v232, 4294901760
    %v234 = vsub.f32 %v232, %v233
    %v235 = vand.u32 %v234, 4294901760
    %236 = vmatpush1.msra.mxu0 %v235
    %237 = vmatprep.subr.mxu0 0.0
    %v238 = vand.u32 %v71, 4294901760
    %v239 = vsub.f32 %v71, %v238
    %v240 = vand.u32 %v239, 4294901760
    %v241 = vsub.f32 %v239, %v240
    %v242 = vand.u32 %v241, 4294901760
    %243 = vmatpush1.msra.mxu0 %v242
    %244 = vmatprep.subr.mxu0 0.0
    %v245 = vand.u32 %v72, 4294901760
    %v246 = vsub.f32 %v72, %v245
    %v247 = vand.u32 %v246, 4294901760
    %v248 = vsub.f32 %v246, %v247
    %v249 = vand.u32 %v248, 4294901760
    %250 = vmatpush1.msra.mxu0 %v249
    %251 = vmatprep.subr.mxu0 0.0
    %v252 = vand.u32 %v73, 4294901760
    %v253 = vsub.f32 %v73, %v252
    %v254 = vand.u32 %v253, 4294901760
    %v255 = vsub.f32 %v253, %v254
    %v256 = vand.u32 %v255, 4294901760
    %257 = vmatpush1.msra.mxu0 %v256
    %258 = vmatprep.subr.mxu0 0.0
    %v259 = vand.u32 %v74, 4294901760
    %v260 = vsub.f32 %v74, %v259
    %v261 = vand.u32 %v260, 4294901760
    %v262 = vsub.f32 %v260, %v261
    %v263 = vand.u32 %v262, 4294901760
    %264 = vmatpush1.msra.mxu0 %v263
    %265 = vmatprep.subr.mxu0 0.0
    %v266 = vand.u32 %v75, 4294901760
    %v267 = vsub.f32 %v75, %v266
    %v268 = vand.u32 %v267, 4294901760
    %v269 = vsub.f32 %v267, %v268
    %v270 = vand.u32 %v269, 4294901760
    %271 = vmatpush1.msra.mxu0 %v270
    %272 = vmatprep.subr.mxu0 0.0
    %v273 = vand.u32 %v76, 4294901760
    %v274 = vsub.f32 %v76, %v273
    %v275 = vand.u32 %v274, 4294901760
    %v276 = vsub.f32 %v274, %v275
    %v277 = vand.u32 %v276, 4294901760
    %278 = vmatpush1.msra.mxu0 %v277
    %279 = vmatprep.subr.mxu0 0.0
    %v280 = vand.u32 %v77, 4294901760
    %v281 = vsub.f32 %v77, %v280
    %v282 = vand.u32 %v281, 4294901760
    %v283 = vsub.f32 %v281, %v282
    %v284 = vand.u32 %v283, 4294901760
    %285 = vmatpush1.msra.mxu0 %v284
    %286 = vmatprep.subr.mxu0 0.0
    %v287 = vand.u32 %v78, 4294901760
    %v288 = vsub.f32 %v78, %v287
    %v289 = vand.u32 %v288, 4294901760
    %v290 = vsub.f32 %v288, %v289
    %v291 = vand.u32 %v290, 4294901760
    %292 = vmatpush1.msra.mxu0 %v291
    %293 = vmatprep.subr.mxu0 0.0
    %v294 = vand.u32 %v79, 4294901760
    %v295 = vsub.f32 %v79, %v294
    %v296 = vand.u32 %v295, 4294901760
    %v297 = vsub.f32 %v295, %v296
    %v298 = vand.u32 %v297, 4294901760
    %299 = vmatpush1.msra.mxu0 %v298
    %300 = vmatprep.subr.mxu0 0.0
    %301 = vmatpush1.msra.mxu0 0.0
    %302 = vmatprep.subr.mxu0 0.0
    %303 = vmatpush1.msra.mxu0 0.0
    %304 = vmatprep.subr.mxu0 0.0
    %305 = vmatpush1.msra.mxu0 0.0
    %306 = vmatprep.subr.mxu0 0.0
    %307 = vmatpush1.msra.mxu0 0.0
    %308 = vmatprep.subr.mxu0 0.0
    %309 = vmatpush1.msra.mxu0 0.0
    %310 = vmatprep.subr.mxu0 0.0
    %311 = vmatpush1.msra.mxu0 0.0
    %312 = vmatprep.subr.mxu0 0.0
    %313 = vmatpush1.msra.mxu0 0.0
    %314 = vmatprep.subr.mxu0 0.0
    %315 = vmatpush1.msra.mxu0 0.0
    %316 = vmatprep.subr.mxu0 0.0
    %317 = vmatpush1.msra.mxu0 0.0
    %318 = vmatprep.subr.mxu0 0.0
    %319 = vmatpush1.msra.mxu0 0.0
    %320 = vmatprep.subr.mxu0 0.0
    %321 = vmatpush1.msra.mxu0 0.0
    %322 = vmatprep.subr.mxu0 0.0
    %323 = vmatpush1.msra.mxu0 0.0
    %324 = vmatprep.subr.mxu0 0.0
    %325 = vmatpush1.msra.mxu0 0.0
    %326 = vmatprep.subr.mxu0 0.0
    %327 = vmatpush1.msra.mxu0 0.0
    %328 = vmatprep.subr.mxu0 0.0
    %329 = vmatpush1.msra.mxu0 0.0
    %330 = vmatprep.subr.mxu0 0.0
    %331 = vmatpush1.msra.mxu0 0.0
    %332 = vmatprep.mubr.f32.mxu0 0.0
    %v333 = vand.u32 %v62, 4294901760
    %334 = vmatmul.mubr.f32.gmra.mrb[0].mxu0 %v333
    %v335 = vpop.f32.mrb[0].mxu0
    %v336 = vadd.f32 %v175, %v335
    %v337 = vpop.f32.mrb[0].mxu0
    %338 = vmatprep.mubr.f32.mxu0 0.0
    %v339 = vand.u32 %v63, 4294901760
    %340 = vmatmul.mubr.f32.gmra.mrb[0].mxu0 %v339
    %v341 = vpop.f32.mrb[0].mxu0
    %v342 = vadd.f32 %v185, %v341
    %v343 = vpop.f32.mrb[0].mxu0
    %344 = vdwg.mxu0
    %345 = vmatprep.subr.mxu0 0.0
    %v346 = vand.u32 %v64, 4294901760
    %v347 = vsub.f32 %v64, %v346
    %348 = vmatpush1.msra.mxu0 %v347
    %349 = vmatprep.subr.mxu0 0.0
    %v350 = vand.u32 %v65, 4294901760
    %v351 = vsub.f32 %v65, %v350
    %352 = vmatpush1.msra.mxu0 %v351
    %353 = vmatprep.subr.mxu0 0.0
    %v354 = vand.u32 %v66, 4294901760
    %v355 = vsub.f32 %v66, %v354
    %356 = vmatpush1.msra.mxu0 %v355
    %357 = vmatprep.subr.mxu0 0.0
    %v358 = vand.u32 %v67, 4294901760
    %v359 = vsub.f32 %v67, %v358
    %360 = vmatpush1.msra.mxu0 %v359
    %361 = vmatprep.subr.mxu0 0.0
    %v362 = vand.u32 %v68, 4294901760
    %v363 = vsub.f32 %v68, %v362
    %364 = vmatpush1.msra.mxu0 %v363
    %365 = vmatprep.subr.mxu0 0.0
    %v366 = vand.u32 %v69, 4294901760
    %v367 = vsub.f32 %v69, %v366
    %368 = vmatpush1.msra.mxu0 %v367
    %369 = vmatprep.subr.mxu0 0.0
    %v370 = vand.u32 %v70, 4294901760
    %v371 = vsub.f32 %v70, %v370
    %372 = vmatpush1.msra.mxu0 %v371
    %373 = vmatprep.subr.mxu0 0.0
    %v374 = vand.u32 %v71, 4294901760
    %v375 = vsub.f32 %v71, %v374
    %376 = vmatpush1.msra.mxu0 %v375
    %377 = vmatprep.subr.mxu0 0.0
    %v378 = vand.u32 %v72, 4294901760
    %v379 = vsub.f32 %v72, %v378
    %380 = vmatpush1.msra.mxu0 %v379
    %381 = vmatprep.subr.mxu0 0.0
    %v382 = vand.u32 %v73, 4294901760
    %v383 = vsub.f32 %v73, %v382
    %384 = vmatpush1.msra.mxu0 %v383
    %385 = vmatprep.subr.mxu0 0.0
    %v386 = vand.u32 %v74, 4294901760
    %v387 = vsub.f32 %v74, %v386
    %388 = vmatpush1.msra.mxu0 %v387
    %389 = vmatprep.subr.mxu0 0.0
    %v390 = vand.u32 %v75, 4294901760
    %v391 = vsub.f32 %v75, %v390
    %392 = vmatpush1.msra.mxu0 %v391
    %393 = vmatprep.subr.mxu0 0.0
    %v394 = vand.u32 %v76, 4294901760
    %v395 = vsub.f32 %v76, %v394
    %396 = vmatpush1.msra.mxu0 %v395
    %397 = vmatprep.subr.mxu0 0.0
    %v398 = vand.u32 %v77, 4294901760
    %v399 = vsub.f32 %v77, %v398
    %400 = vmatpush1.msra.mxu0 %v399
    %401 = vmatprep.subr.mxu0 0.0
    %v402 = vand.u32 %v78, 4294901760
    %v403 = vsub.f32 %v78, %v402
    %404 = vmatpush1.msra.mxu0 %v403
    %405 = vmatprep.subr.mxu0 0.0
    %v406 = vand.u32 %v79, 4294901760
    %v407 = vsub.f32 %v79, %v406
    %408 = vmatpush1.msra.mxu0 %v407
    %409 = vmatprep.subr.mxu0 0.0
    %410 = vmatpush1.msra.mxu0 0.0
    %411 = vmatprep.subr.mxu0 0.0
    %412 = vmatpush1.msra.mxu0 0.0
    %413 = vmatprep.subr.mxu0 0.0
    %414 = vmatpush1.msra.mxu0 0.0
    %415 = vmatprep.subr.mxu0 0.0
    %416 = vmatpush1.msra.mxu0 0.0
    %417 = vmatprep.subr.mxu0 0.0
    %418 = vmatpush1.msra.mxu0 0.0
    %419 = vmatprep.subr.mxu0 0.0
    %420 = vmatpush1.msra.mxu0 0.0
    %421 = vmatprep.subr.mxu0 0.0
    %422 = vmatpush1.msra.mxu0 0.0
    %423 = vmatprep.subr.mxu0 0.0
    %424 = vmatpush1.msra.mxu0 0.0
    %425 = vmatprep.subr.mxu0 0.0
    %426 = vmatpush1.msra.mxu0 0.0
    %427 = vmatprep.subr.mxu0 0.0
    %428 = vmatpush1.msra.mxu0 0.0
    %429 = vmatprep.subr.mxu0 0.0
    %430 = vmatpush1.msra.mxu0 0.0
    %431 = vmatprep.subr.mxu0 0.0
    %432 = vmatpush1.msra.mxu0 0.0
    %433 = vmatprep.subr.mxu0 0.0
    %434 = vmatpush1.msra.mxu0 0.0
    %435 = vmatprep.subr.mxu0 0.0
    %436 = vmatpush1.msra.mxu0 0.0
    %437 = vmatprep.subr.mxu0 0.0
    %438 = vmatpush1.msra.mxu0 0.0
    %439 = vmatprep.subr.mxu0 0.0
    %440 = vmatpush1.msra.mxu0 0.0
    %441 = vmatprep.mubr.f32.mxu0 0.0
    %v442 = vand.u32 %v62, 4294901760
    %v443 = vsub.f32 %v62, %v442
    %444 = vmatmul.mubr.f32.gmra.mrb[0].mxu0 %v443
    %v445 = vpop.f32.mrb[0].mxu0
    %v446 = vadd.f32 %v336, %v445
    %v447 = vpop.f32.mrb[0].mxu0
    %448 = vmatprep.mubr.f32.mxu0 0.0
    %v449 = vand.u32 %v63, 4294901760
    %v450 = vsub.f32 %v63, %v449
    %451 = vmatmul.mubr.f32.gmra.mrb[0].mxu0 %v450
    %v452 = vpop.f32.mrb[0].mxu0
    %v453 = vadd.f32 %v342, %v452
    %v454 = vpop.f32.mrb[0].mxu0
    %455 = vdwg.mxu0
    %456 = vmatprep.subr.mxu0 0.0
    %v457 = vand.u32 %v64, 4294901760
    %458 = vmatpush1.msra.mxu0 %v457
    %459 = vmatprep.subr.mxu0 0.0
    %v460 = vand.u32 %v65, 4294901760
    %461 = vmatpush1.msra.mxu0 %v460
    %462 = vmatprep.subr.mxu0 0.0
    %v463 = vand.u32 %v66, 4294901760
    %464 = vmatpush1.msra.mxu0 %v463
    %465 = vmatprep.subr.mxu0 0.0
    %v466 = vand.u32 %v67, 4294901760
    %467 = vmatpush1.msra.mxu0 %v466
    %468 = vmatprep.subr.mxu0 0.0
    %v469 = vand.u32 %v68, 4294901760
    %470 = vmatpush1.msra.mxu0 %v469
    %471 = vmatprep.subr.mxu0 0.0
    %v472 = vand.u32 %v69, 4294901760
    %473 = vmatpush1.msra.mxu0 %v472
    %474 = vmatprep.subr.mxu0 0.0
    %v475 = vand.u32 %v70, 4294901760
    %476 = vmatpush1.msra.mxu0 %v475
    %477 = vmatprep.subr.mxu0 0.0
    %v478 = vand.u32 %v71, 4294901760
    %479 = vmatpush1.msra.mxu0 %v478
    %480 = vmatprep.subr.mxu0 0.0
    %v481 = vand.u32 %v72, 4294901760
    %482 = vmatpush1.msra.mxu0 %v481
    %483 = vmatprep.subr.mxu0 0.0
    %v484 = vand.u32 %v73, 4294901760
    %485 = vmatpush1.msra.mxu0 %v484
    %486 = vmatprep.subr.mxu0 0.0
    %v487 = vand.u32 %v74, 4294901760
    %488 = vmatpush1.msra.mxu0 %v487
    %489 = vmatprep.subr.mxu0 0.0
    %v490 = vand.u32 %v75, 4294901760
    %491 = vmatpush1.msra.mxu0 %v490
    %492 = vmatprep.subr.mxu0 0.0
    %v493 = vand.u32 %v76, 4294901760
    %494 = vmatpush1.msra.mxu0 %v493
    %495 = vmatprep.subr.mxu0 0.0
    %v496 = vand.u32 %v77, 4294901760
    %497 = vmatpush1.msra.mxu0 %v496
    %498 = vmatprep.subr.mxu0 0.0
    %v499 = vand.u32 %v78, 4294901760
    %500 = vmatpush1.msra.mxu0 %v499
    %501 = vmatprep.subr.mxu0 0.0
    %v502 = vand.u32 %v79, 4294901760
    %503 = vmatpush1.msra.mxu0 %v502
    %504 = vmatprep.subr.mxu0 0.0
    %505 = vmatpush1.msra.mxu0 0.0
    %506 = vmatprep.subr.mxu0 0.0
    %507 = vmatpush1.msra.mxu0 0.0
    %508 = vmatprep.subr.mxu0 0.0
    %509 = vmatpush1.msra.mxu0 0.0
    %510 = vmatprep.subr.mxu0 0.0
    %511 = vmatpush1.msra.mxu0 0.0
    %512 = vmatprep.subr.mxu0 0.0
    %513 = vmatpush1.msra.mxu0 0.0
    %514 = vmatprep.subr.mxu0 0.0
    %515 = vmatpush1.msra.mxu0 0.0
    %516 = vmatprep.subr.mxu0 0.0
    %517 = vmatpush1.msra.mxu0 0.0
    %518 = vmatprep.subr.mxu0 0.0
    %519 = vmatpush1.msra.mxu0 0.0
    %520 = vmatprep.subr.mxu0 0.0
    %521 = vmatpush1.msra.mxu0 0.0
    %522 = vmatprep.subr.mxu0 0.0
    %523 = vmatpush1.msra.mxu0 0.0
    %524 = vmatprep.subr.mxu0 0.0
    %525 = vmatpush1.msra.mxu0 0.0
    %526 = vmatprep.subr.mxu0 0.0
    %527 = vmatpush1.msra.mxu0 0.0
    %528 = vmatprep.subr.mxu0 0.0
    %529 = vmatpush1.msra.mxu0 0.0
    %530 = vmatprep.subr.mxu0 0.0
    %531 = vmatpush1.msra.mxu0 0.0
    %532 = vmatprep.subr.mxu0 0.0
    %533 = vmatpush1.msra.mxu0 0.0
    %534 = vmatprep.subr.mxu0 0.0
    %535 = vmatpush1.msra.mxu0 0.0
    %536 = vmatprep.mubr.f32.mxu0 0.0
    %v537 = vand.u32 %v62, 4294901760
    %v538 = vsub.f32 %v62, %v537
    %v539 = vand.u32 %v538, 4294901760
    %540 = vmatmul.mubr.f32.gmra.mrb[0].mxu0 %v539
    %v541 = vpop.f32.mrb[0].mxu0
    %v542 = vadd.f32 %v446, %v541
    %v543 = vpop.f32.mrb[0].mxu0
    %544 = vmatprep.mubr.f32.mxu0 0.0
    %v545 = vand.u32 %v63, 4294901760
    %v546 = vsub.f32 %v63, %v545
    %v547 = vand.u32 %v546, 4294901760
    %548 = vmatmul.mubr.f32.gmra.mrb[0].mxu0 %v547
    %v549 = vpop.f32.mrb[0].mxu0
    %v550 = vadd.f32 %v453, %v549
    %v551 = vpop.f32.mrb[0].mxu0
    %552 = vdwg.mxu0
    %553 = vmatprep.subr.mxu0 0.0
    %v554 = vand.u32 %v64, 4294901760
    %v555 = vsub.f32 %v64, %v554
    %v556 = vand.u32 %v555, 4294901760
    %557 = vmatpush1.msra.mxu0 %v556
    %558 = vmatprep.subr.mxu0 0.0
    %v559 = vand.u32 %v65, 4294901760
    %v560 = vsub.f32 %v65, %v559
    %v561 = vand.u32 %v560, 4294901760
    %562 = vmatpush1.msra.mxu0 %v561
    %563 = vmatprep.subr.mxu0 0.0
    %v564 = vand.u32 %v66, 4294901760
    %v565 = vsub.f32 %v66, %v564
    %v566 = vand.u32 %v565, 4294901760
    %567 = vmatpush1.msra.mxu0 %v566
    %568 = vmatprep.subr.mxu0 0.0
    %v569 = vand.u32 %v67, 4294901760
    %v570 = vsub.f32 %v67, %v569
    %v571 = vand.u32 %v570, 4294901760
    %572 = vmatpush1.msra.mxu0 %v571
    %573 = vmatprep.subr.mxu0 0.0
    %v574 = vand.u32 %v68, 4294901760
    %v575 = vsub.f32 %v68, %v574
    %v576 = vand.u32 %v575, 4294901760
    %577 = vmatpush1.msra.mxu0 %v576
    %578 = vmatprep.subr.mxu0 0.0
    %v579 = vand.u32 %v69, 4294901760
    %v580 = vsub.f32 %v69, %v579
    %v581 = vand.u32 %v580, 4294901760
    %582 = vmatpush1.msra.mxu0 %v581
    %583 = vmatprep.subr.mxu0 0.0
    %v584 = vand.u32 %v70, 4294901760
    %v585 = vsub.f32 %v70, %v584
    %v586 = vand.u32 %v585, 4294901760
    %587 = vmatpush1.msra.mxu0 %v586
    %588 = vmatprep.subr.mxu0 0.0
    %v589 = vand.u32 %v71, 4294901760
    %v590 = vsub.f32 %v71, %v589
    %v591 = vand.u32 %v590, 4294901760
    %592 = vmatpush1.msra.mxu0 %v591
    %593 = vmatprep.subr.mxu0 0.0
    %v594 = vand.u32 %v72, 4294901760
    %v595 = vsub.f32 %v72, %v594
    %v596 = vand.u32 %v595, 4294901760
    %597 = vmatpush1.msra.mxu0 %v596
    %598 = vmatprep.subr.mxu0 0.0
    %v599 = vand.u32 %v73, 4294901760
    %v600 = vsub.f32 %v73, %v599
    %v601 = vand.u32 %v600, 4294901760
    %602 = vmatpush1.msra.mxu0 %v601
    %603 = vmatprep.subr.mxu0 0.0
    %v604 = vand.u32 %v74, 4294901760
    %v605 = vsub.f32 %v74, %v604
    %v606 = vand.u32 %v605, 4294901760
    %607 = vmatpush1.msra.mxu0 %v606
    %608 = vmatprep.subr.mxu0 0.0
    %v609 = vand.u32 %v75, 4294901760
    %v610 = vsub.f32 %v75, %v609
    %v611 = vand.u32 %v610, 4294901760
    %612 = vmatpush1.msra.mxu0 %v611
    %613 = vmatprep.subr.mxu0 0.0
    %v614 = vand.u32 %v76, 4294901760
    %v615 = vsub.f32 %v76, %v614
    %v616 = vand.u32 %v615, 4294901760
    %617 = vmatpush1.msra.mxu0 %v616
    %618 = vmatprep.subr.mxu0 0.0
    %v619 = vand.u32 %v77, 4294901760
    %v620 = vsub.f32 %v77, %v619
    %v621 = vand.u32 %v620, 4294901760
    %622 = vmatpush1.msra.mxu0 %v621
    %623 = vmatprep.subr.mxu0 0.0
    %v624 = vand.u32 %v78, 4294901760
    %v625 = vsub.f32 %v78, %v624
    %v626 = vand.u32 %v625, 4294901760
    %627 = vmatpush1.msra.mxu0 %v626
    %628 = vmatprep.subr.mxu0 0.0
    %v629 = vand.u32 %v79, 4294901760
    %v630 = vsub.f32 %v79, %v629
    %v631 = vand.u32 %v630, 4294901760
    %632 = vmatpush1.msra.mxu0 %v631
    %633 = vmatprep.subr.mxu0 0.0
    %634 = vmatpush1.msra.mxu0 0.0
    %635 = vmatprep.subr.mxu0 0.0
    %636 = vmatpush1.msra.mxu0 0.0
    %637 = vmatprep.subr.mxu0 0.0
    %638 = vmatpush1.msra.mxu0 0.0
    %639 = vmatprep.subr.mxu0 0.0
    %640 = vmatpush1.msra.mxu0 0.0
    %641 = vmatprep.subr.mxu0 0.0
    %642 = vmatpush1.msra.mxu0 0.0
    %643 = vmatprep.subr.mxu0 0.0
    %644 = vmatpush1.msra.mxu0 0.0
    %645 = vmatprep.subr.mxu0 0.0
    %646 = vmatpush1.msra.mxu0 0.0
    %647 = vmatprep.subr.mxu0 0.0
    %648 = vmatpush1.msra.mxu0 0.0
    %649 = vmatprep.subr.mxu0 0.0
    %650 = vmatpush1.msra.mxu0 0.0
    %651 = vmatprep.subr.mxu0 0.0
    %652 = vmatpush1.msra.mxu0 0.0
    %653 = vmatprep.subr.mxu0 0.0
    %654 = vmatpush1.msra.mxu0 0.0
    %655 = vmatprep.subr.mxu0 0.0
    %656 = vmatpush1.msra.mxu0 0.0
    %657 = vmatprep.subr.mxu0 0.0
    %658 = vmatpush1.msra.mxu0 0.0
    %659 = vmatprep.subr.mxu0 0.0
    %660 = vmatpush1.msra.mxu0 0.0
    %661 = vmatprep.subr.mxu0 0.0
    %662 = vmatpush1.msra.mxu0 0.0
    %663 = vmatprep.subr.mxu0 0.0
    %664 = vmatpush1.msra.mxu0 0.0
    %665 = vmatprep.mubr.f32.mxu0 0.0
    %v666 = vand.u32 %v62, 4294901760
    %667 = vmatmul.mubr.f32.gmra.mrb[0].mxu0 %v666
    %v668 = vpop.f32.mrb[0].mxu0
    %v669 = vadd.f32 %v542, %v668
    %v670 = vpop.f32.mrb[0].mxu0
    %671 = vmatprep.mubr.f32.mxu0 0.0
    %v672 = vand.u32 %v63, 4294901760
    %673 = vmatmul.mubr.f32.gmra.mrb[0].mxu0 %v672
    %v674 = vpop.f32.mrb[0].mxu0
    %v675 = vadd.f32 %v550, %v674
    %v676 = vpop.f32.mrb[0].mxu0
    %677 = vdwg.mxu0
    %678 = vmatprep.subr.mxu0 0.0
    %v679 = vand.u32 %v64, 4294901760
    %680 = vmatpush1.msra.mxu0 %v679
    %681 = vmatprep.subr.mxu0 0.0
    %v682 = vand.u32 %v65, 4294901760
    %683 = vmatpush1.msra.mxu0 %v682
    %684 = vmatprep.subr.mxu0 0.0
    %v685 = vand.u32 %v66, 4294901760
    %686 = vmatpush1.msra.mxu0 %v685
    %687 = vmatprep.subr.mxu0 0.0
    %v688 = vand.u32 %v67, 4294901760
    %689 = vmatpush1.msra.mxu0 %v688
    %690 = vmatprep.subr.mxu0 0.0
    %v691 = vand.u32 %v68, 4294901760
    %692 = vmatpush1.msra.mxu0 %v691
    %693 = vmatprep.subr.mxu0 0.0
    %v694 = vand.u32 %v69, 4294901760
    %695 = vmatpush1.msra.mxu0 %v694
    %696 = vmatprep.subr.mxu0 0.0
    %v697 = vand.u32 %v70, 4294901760
    %698 = vmatpush1.msra.mxu0 %v697
    %699 = vmatprep.subr.mxu0 0.0
    %v700 = vand.u32 %v71, 4294901760
    %701 = vmatpush1.msra.mxu0 %v700
    %702 = vmatprep.subr.mxu0 0.0
    %v703 = vand.u32 %v72, 4294901760
    %704 = vmatpush1.msra.mxu0 %v703
    %705 = vmatprep.subr.mxu0 0.0
    %v706 = vand.u32 %v73, 4294901760
    %707 = vmatpush1.msra.mxu0 %v706
    %708 = vmatprep.subr.mxu0 0.0
    %v709 = vand.u32 %v74, 4294901760
    %710 = vmatpush1.msra.mxu0 %v709
    %711 = vmatprep.subr.mxu0 0.0
    %v712 = vand.u32 %v75, 4294901760
    %713 = vmatpush1.msra.mxu0 %v712
    %714 = vmatprep.subr.mxu0 0.0
    %v715 = vand.u32 %v76, 4294901760
    %716 = vmatpush1.msra.mxu0 %v715
    %717 = vmatprep.subr.mxu0 0.0
    %v718 = vand.u32 %v77, 4294901760
    %719 = vmatpush1.msra.mxu0 %v718
    %720 = vmatprep.subr.mxu0 0.0
    %v721 = vand.u32 %v78, 4294901760
    %722 = vmatpush1.msra.mxu0 %v721
    %723 = vmatprep.subr.mxu0 0.0
    %v724 = vand.u32 %v79, 4294901760
    %725 = vmatpush1.msra.mxu0 %v724
    %726 = vmatprep.subr.mxu0 0.0
    %727 = vmatpush1.msra.mxu0 0.0
    %728 = vmatprep.subr.mxu0 0.0
    %729 = vmatpush1.msra.mxu0 0.0
    %730 = vmatprep.subr.mxu0 0.0
    %731 = vmatpush1.msra.mxu0 0.0
    %732 = vmatprep.subr.mxu0 0.0
    %733 = vmatpush1.msra.mxu0 0.0
    %734 = vmatprep.subr.mxu0 0.0
    %735 = vmatpush1.msra.mxu0 0.0
    %736 = vmatprep.subr.mxu0 0.0
    %737 = vmatpush1.msra.mxu0 0.0
    %738 = vmatprep.subr.mxu0 0.0
    %739 = vmatpush1.msra.mxu0 0.0
    %740 = vmatprep.subr.mxu0 0.0
    %741 = vmatpush1.msra.mxu0 0.0
    %742 = vmatprep.subr.mxu0 0.0
    %743 = vmatpush1.msra.mxu0 0.0
    %744 = vmatprep.subr.mxu0 0.0
    %745 = vmatpush1.msra.mxu0 0.0
    %746 = vmatprep.subr.mxu0 0.0
    %747 = vmatpush1.msra.mxu0 0.0
    %748 = vmatprep.subr.mxu0 0.0
    %749 = vmatpush1.msra.mxu0 0.0
    %750 = vmatprep.subr.mxu0 0.0
    %751 = vmatpush1.msra.mxu0 0.0
    %752 = vmatprep.subr.mxu0 0.0
    %753 = vmatpush1.msra.mxu0 0.0
    %754 = vmatprep.subr.mxu0 0.0
    %755 = vmatpush1.msra.mxu0 0.0
    %756 = vmatprep.subr.mxu0 0.0
    %757 = vmatpush1.msra.mxu0 0.0
    %758 = vmatprep.mubr.f32.mxu0 0.0
    %v759 = vand.u32 %v62, 4294901760
    %760 = vmatmul.mubr.f32.gmra.mrb[0].mxu0 %v759
    %v761 = vpop.f32.mrb[0].mxu0
    %v762 = vadd.f32 %v669, %v761
    %v763 = vpop.f32.mrb[0].mxu0
    %764 = vmatprep.mubr.f32.mxu0 0.0
    %v765 = vand.u32 %v63, 4294901760
    %766 = vmatmul.mubr.f32.gmra.mrb[0].mxu0 %v765
    %v767 = vpop.f32.mrb[0].mxu0
    %v768 = vadd.f32 %v675, %v767
    %v769 = vpop.f32.mrb[0].mxu0
    %770 = vdwg.mxu0
    %v771 = vmul.f32 %v762, 0.5
    %v772 = vmul.f32 %v768, 0.5
    %v773 = vmul.f32 %v762, 0.70710677
    %v774 = vmul.f32 %v768, 0.70710677
    %v775 = verf.f32.pop %v773
    %v776 = verf.f32.pop %v774
    %v777 = vadd.f32 %v775, 1.0
    %v778 = vadd.f32 %v776, 1.0
    %v779 = vmul.f32 %v771, %v777
    %v780 = vmul.f32 %v772, %v778
    %v781 = vld [vmem:[#allocation7] sm:$0xff]
    %v782 = vld [vmem:[#allocation7 + $0x8] sm:$0xff]
    %v783 = vld [vmem:[#allocation7 + $0x10] sm:$0xff]
    %v784 = vld [vmem:[#allocation7 + $0x18] sm:$0xff]
    %v785 = vld [vmem:[#allocation7 + $0x20] sm:$0xff]
    %v786 = vld [vmem:[#allocation7 + $0x28] sm:$0xff]
    %v787 = vld [vmem:[#allocation7 + $0x30] sm:$0xff]
    %v788 = vld [vmem:[#allocation7 + $0x38] sm:$0xff]
    %v789 = vld [vmem:[#allocation7 + $0x40] sm:$0xff]
    %v790 = vld [vmem:[#allocation7 + $0x48] sm:$0xff]
    %v791 = vld [vmem:[#allocation7 + $0x50] sm:$0xff]
    %v792 = vld [vmem:[#allocation7 + $0x58] sm:$0xff]
    %v793 = vld [vmem:[#allocation7 + $0x60] sm:$0xff]
    %v794 = vld [vmem:[#allocation7 + $0x68] sm:$0xff]
    %v795 = vld [vmem:[#allocation7 + $0x70] sm:$0xff]
    %v796 = vld [vmem:[#allocation7 + $0x78] sm:$0xff]
    %v797 = vld [vmem:[%s4] sm:$0x1]
    %v799 = vlaneseq
    %v800 = vshrl.u32 %v799, 7
    %v801 = vsub.s32 0, %v800
    %v802 = vrot.slane %v797, %v801
    %804 = vmatprep.subr.mxu0 0.0
    %v805 = vand.u32 %v781, 4294901760
    %806 = vmatpush1.msra.mxu0 %v805
    %807 = vmatprep.subr.mxu0 0.0
    %v808 = vand.u32 %v782, 4294901760
    %809 = vmatpush1.msra.mxu0 %v808
    %810 = vmatprep.subr.mxu0 0.0
    %v811 = vand.u32 %v783, 4294901760
    %812 = vmatpush1.msra.mxu0 %v811
    %813 = vmatprep.subr.mxu0 0.0
    %v814 = vand.u32 %v784, 4294901760
    %815 = vmatpush1.msra.mxu0 %v814
    %816 = vmatprep.subr.mxu0 0.0
    %v817 = vand.u32 %v785, 4294901760
    %818 = vmatpush1.msra.mxu0 %v817
    %819 = vmatprep.subr.mxu0 0.0
    %v820 = vand.u32 %v786, 4294901760
    %821 = vmatpush1.msra.mxu0 %v820
    %822 = vmatprep.subr.mxu0 0.0
    %v823 = vand.u32 %v787, 4294901760
    %824 = vmatpush1.msra.mxu0 %v823
    %825 = vmatprep.subr.mxu0 0.0
    %v826 = vand.u32 %v788, 4294901760
    %827 = vmatpush1.msra.mxu0 %v826
    %828 = vmatprep.subr.mxu0 0.0
    %v829 = vand.u32 %v789, 4294901760
    %830 = vmatpush1.msra.mxu0 %v829
    %831 = vmatprep.subr.mxu0 0.0
    %v832 = vand.u32 %v790, 4294901760
    %833 = vmatpush1.msra.mxu0 %v832
    %834 = vmatprep.subr.mxu0 0.0
    %v835 = vand.u32 %v791, 4294901760
    %836 = vmatpush1.msra.mxu0 %v835
    %837 = vmatprep.subr.mxu0 0.0
    %v838 = vand.u32 %v792, 4294901760
    %839 = vmatpush1.msra.mxu0 %v838
    %840 = vmatprep.subr.mxu0 0.0
    %v841 = vand.u32 %v793, 4294901760
    %842 = vmatpush1.msra.mxu0 %v841
    %843 = vmatprep.subr.mxu0 0.0
    %v844 = vand.u32 %v794, 4294901760
    %845 = vmatpush1.msra.mxu0 %v844
    %846 = vmatprep.subr.mxu0 0.0
    %v847 = vand.u32 %v795, 4294901760
    %848 = vmatpush1.msra.mxu0 %v847
    %849 = vmatprep.subr.mxu0 0.0
    %v850 = vand.u32 %v796, 4294901760
    %851 = vmatpush1.msra.mxu0 %v850
    %852 = vmatprep.subr.mxu0 0.0
    %853 = vmatpush1.msra.mxu0 0.0
    %854 = vmatprep.subr.mxu0 0.0
    %855 = vmatpush1.msra.mxu0 0.0
    %856 = vmatprep.subr.mxu0 0.0
    %857 = vmatpush1.msra.mxu0 0.0
    %858 = vmatprep.subr.mxu0 0.0
    %859 = vmatpush1.msra.mxu0 0.0
    %860 = vmatprep.subr.mxu0 0.0
    %861 = vmatpush1.msra.mxu0 0.0
    %862 = vmatprep.subr.mxu0 0.0
    %863 = vmatpush1.msra.mxu0 0.0
    %864 = vmatprep.subr.mxu0 0.0
    %865 = vmatpush1.msra.mxu0 0.0
    %866 = vmatprep.subr.mxu0 0.0
    %867 = vmatpush1.msra.mxu0 0.0
    %868 = vmatprep.subr.mxu0 0.0
    %869 = vmatpush1.msra.mxu0 0.0
    %870 = vmatprep.subr.mxu0 0.0
    %871 = vmatpush1.msra.mxu0 0.0
    %872 = vmatprep.subr.mxu0 0.0
    %873 = vmatpush1.msra.mxu0 0.0
    %874 = vmatprep.subr.mxu0 0.0
    %875 = vmatpush1.msra.mxu0 0.0
    %876 = vmatprep.subr.mxu0 0.0
    %877 = vmatpush1.msra.mxu0 0.0
    %878 = vmatprep.subr.mxu0 0.0
    %879 = vmatpush1.msra.mxu0 0.0
    %880 = vmatprep.subr.mxu0 0.0
    %881 = vmatpush1.msra.mxu0 0.0
    %882 = vmatprep.subr.mxu0 0.0
    %883 = vmatpush1.msra.mxu0 0.0
    %884 = vmatprep.mubr.f32.mxu0 0.0
    %v885 = vand.u32 %v779, 4294901760
    %v886 = vsub.f32 %v779, %v885
    %v887 = vand.u32 %v886, 4294901760
    %v888 = vsub.f32 %v886, %v887
    %v889 = vand.u32 %v888, 4294901760
    %890 = vmatmul.mubr.f32.gmra.mrb[0].mxu0 %v889
    %v891 = vpop.f32.mrb[0].mxu0
    %v892 = vadd.f32 %v802, %v891
    %v893 = vpop.f32.mrb[0].mxu0
    %894 = vmatprep.mubr.f32.mxu0 0.0
    %v895 = vand.u32 %v780, 4294901760
    %v896 = vsub.f32 %v780, %v895
    %v897 = vand.u32 %v896, 4294901760
    %v898 = vsub.f32 %v896, %v897
    %v899 = vand.u32 %v898, 4294901760
    %900 = vmatmul.mubr.f32.gmra.mrb[0].mxu0 %v899
    %v901 = vpop.f32.mrb[0].mxu0
    %v902 = vadd.f32 %v802, %v901
    %v903 = vpop.f32.mrb[0].mxu0
    %904 = vdwg.mxu0
    %905 = vmatprep.subr.mxu0 0.0
    %v906 = vand.u32 %v781, 4294901760
    %v907 = vsub.f32 %v781, %v906
    %v908 = vand.u32 %v907, 4294901760
    %v909 = vsub.f32 %v907, %v908
    %v910 = vand.u32 %v909, 4294901760
    %911 = vmatpush1.msra.mxu0 %v910
    %912 = vmatprep.subr.mxu0 0.0
    %v913 = vand.u32 %v782, 4294901760
    %v914 = vsub.f32 %v782, %v913
    %v915 = vand.u32 %v914, 4294901760
    %v916 = vsub.f32 %v914, %v915
    %v917 = vand.u32 %v916, 4294901760
    %918 = vmatpush1.msra.mxu0 %v917
    %919 = vmatprep.subr.mxu0 0.0
    %v920 = vand.u32 %v783, 4294901760
    %v921 = vsub.f32 %v783, %v920
    %v922 = vand.u32 %v921, 4294901760
    %v923 = vsub.f32 %v921, %v922
    %v924 = vand.u32 %v923, 4294901760
    %925 = vmatpush1.msra.mxu0 %v924
    %926 = vmatprep.subr.mxu0 0.0
    %v927 = vand.u32 %v784, 4294901760
    %v928 = vsub.f32 %v784, %v927
    %v929 = vand.u32 %v928, 4294901760
    %v930 = vsub.f32 %v928, %v929
    %v931 = vand.u32 %v930, 4294901760
    %932 = vmatpush1.msra.mxu0 %v931
    %933 = vmatprep.subr.mxu0 0.0
    %v934 = vand.u32 %v785, 4294901760
    %v935 = vsub.f32 %v785, %v934
    %v936 = vand.u32 %v935, 4294901760
    %v937 = vsub.f32 %v935, %v936
    %v938 = vand.u32 %v937, 4294901760
    %939 = vmatpush1.msra.mxu0 %v938
    %940 = vmatprep.subr.mxu0 0.0
    %v941 = vand.u32 %v786, 4294901760
    %v942 = vsub.f32 %v786, %v941
    %v943 = vand.u32 %v942, 4294901760
    %v944 = vsub.f32 %v942, %v943
    %v945 = vand.u32 %v944, 4294901760
    %946 = vmatpush1.msra.mxu0 %v945
    %947 = vmatprep.subr.mxu0 0.0
    %v948 = vand.u32 %v787, 4294901760
    %v949 = vsub.f32 %v787, %v948
    %v950 = vand.u32 %v949, 4294901760
    %v951 = vsub.f32 %v949, %v950
    %v952 = vand.u32 %v951, 4294901760
    %953 = vmatpush1.msra.mxu0 %v952
    %954 = vmatprep.subr.mxu0 0.0
    %v955 = vand.u32 %v788, 4294901760
    %v956 = vsub.f32 %v788, %v955
    %v957 = vand.u32 %v956, 4294901760
    %v958 = vsub.f32 %v956, %v957
    %v959 = vand.u32 %v958, 4294901760
    %960 = vmatpush1.msra.mxu0 %v959
    %961 = vmatprep.subr.mxu0 0.0
    %v962 = vand.u32 %v789, 4294901760
    %v963 = vsub.f32 %v789, %v962
    %v964 = vand.u32 %v963, 4294901760
    %v965 = vsub.f32 %v963, %v964
    %v966 = vand.u32 %v965, 4294901760
    %967 = vmatpush1.msra.mxu0 %v966
    %968 = vmatprep.subr.mxu0 0.0
    %v969 = vand.u32 %v790, 4294901760
    %v970 = vsub.f32 %v790, %v969
    %v971 = vand.u32 %v970, 4294901760
    %v972 = vsub.f32 %v970, %v971
    %v973 = vand.u32 %v972, 4294901760
    %974 = vmatpush1.msra.mxu0 %v973
    %975 = vmatprep.subr.mxu0 0.0
    %v976 = vand.u32 %v791, 4294901760
    %v977 = vsub.f32 %v791, %v976
    %v978 = vand.u32 %v977, 4294901760
    %v979 = vsub.f32 %v977, %v978
    %v980 = vand.u32 %v979, 4294901760
    %981 = vmatpush1.msra.mxu0 %v980
    %982 = vmatprep.subr.mxu0 0.0
    %v983 = vand.u32 %v792, 4294901760
    %v984 = vsub.f32 %v792, %v983
    %v985 = vand.u32 %v984, 4294901760
    %v986 = vsub.f32 %v984, %v985
    %v987 = vand.u32 %v986, 4294901760
    %988 = vmatpush1.msra.mxu0 %v987
    %989 = vmatprep.subr.mxu0 0.0
    %v990 = vand.u32 %v793, 4294901760
    %v991 = vsub.f32 %v793, %v990
    %v992 = vand.u32 %v991, 4294901760
    %v993 = vsub.f32 %v991, %v992
    %v994 = vand.u32 %v993, 4294901760
    %995 = vmatpush1.msra.mxu0 %v994
    %996 = vmatprep.subr.mxu0 0.0
    %v997 = vand.u32 %v794, 4294901760
    %v998 = vsub.f32 %v794, %v997
    %v999 = vand.u32 %v998, 4294901760
    %v1000 = vsub.f32 %v998, %v999
    %v1001 = vand.u32 %v1000, 4294901760
    %1002 = vmatpush1.msra.mxu0 %v1001
    %1003 = vmatprep.subr.mxu0 0.0
    %v1004 = vand.u32 %v795, 4294901760
    %v1005 = vsub.f32 %v795, %v1004
    %v1006 = vand.u32 %v1005, 4294901760
    %v1007 = vsub.f32 %v1005, %v1006
    %v1008 = vand.u32 %v1007, 4294901760
    %1009 = vmatpush1.msra.mxu0 %v1008
    %1010 = vmatprep.subr.mxu0 0.0
    %v1011 = vand.u32 %v796, 4294901760
    %v1012 = vsub.f32 %v796, %v1011
    %v1013 = vand.u32 %v1012, 4294901760
    %v1014 = vsub.f32 %v1012, %v1013
    %v1015 = vand.u32 %v1014, 4294901760
    %1016 = vmatpush1.msra.mxu0 %v1015
    %1017 = vmatprep.subr.mxu0 0.0
    %1018 = vmatpush1.msra.mxu0 0.0
    %1019 = vmatprep.subr.mxu0 0.0
    %1020 = vmatpush1.msra.mxu0 0.0
    %1021 = vmatprep.subr.mxu0 0.0
    %1022 = vmatpush1.msra.mxu0 0.0
    %1023 = vmatprep.subr.mxu0 0.0
    %1024 = vmatpush1.msra.mxu0 0.0
    %1025 = vmatprep.subr.mxu0 0.0
    %1026 = vmatpush1.msra.mxu0 0.0
    %1027 = vmatprep.subr.mxu0 0.0
    %1028 = vmatpush1.msra.mxu0 0.0
    %1029 = vmatprep.subr.mxu0 0.0
    %1030 = vmatpush1.msra.mxu0 0.0
    %1031 = vmatprep.subr.mxu0 0.0
    %1032 = vmatpush1.msra.mxu0 0.0
    %1033 = vmatprep.subr.mxu0 0.0
    %1034 = vmatpush1.msra.mxu0 0.0
    %1035 = vmatprep.subr.mxu0 0.0
    %1036 = vmatpush1.msra.mxu0 0.0
    %1037 = vmatprep.subr.mxu0 0.0
    %1038 = vmatpush1.msra.mxu0 0.0
    %1039 = vmatprep.subr.mxu0 0.0
    %1040 = vmatpush1.msra.mxu0 0.0
    %1041 = vmatprep.subr.mxu0 0.0
    %1042 = vmatpush1.msra.mxu0 0.0
    %1043 = vmatprep.subr.mxu0 0.0
    %1044 = vmatpush1.msra.mxu0 0.0
    %1045 = vmatprep.subr.mxu0 0.0
    %1046 = vmatpush1.msra.mxu0 0.0
    %1047 = vmatprep.subr.mxu0 0.0
    %1048 = vmatpush1.msra.mxu0 0.0
    %1049 = vmatprep.mubr.f32.mxu0 0.0
    %v1050 = vand.u32 %v779, 4294901760
    %1051 = vmatmul.mubr.f32.gmra.mrb[0].mxu0 %v1050
    %v1052 = vpop.f32.mrb[0].mxu0
    %v1053 = vadd.f32 %v892, %v1052
    %v1054 = vpop.f32.mrb[0].mxu0
    %1055 = vmatprep.mubr.f32.mxu0 0.0
    %v1056 = vand.u32 %v780, 4294901760
    %1057 = vmatmul.mubr.f32.gmra.mrb[0].mxu0 %v1056
    %v1058 = vpop.f32.mrb[0].mxu0
    %v1059 = vadd.f32 %v902, %v1058
    %v1060 = vpop.f32.mrb[0].mxu0
    %1061 = vdwg.mxu0
    %1062 = vmatprep.subr.mxu0 0.0
    %v1063 = vand.u32 %v781, 4294901760
    %v1064 = vsub.f32 %v781, %v1063
    %1065 = vmatpush1.msra.mxu0 %v1064
    %1066 = vmatprep.subr.mxu0 0.0
    %v1067 = vand.u32 %v782, 4294901760
    %v1068 = vsub.f32 %v782, %v1067
    %1069 = vmatpush1.msra.mxu0 %v1068
    %1070 = vmatprep.subr.mxu0 0.0
    %v1071 = vand.u32 %v783, 4294901760
    %v1072 = vsub.f32 %v783, %v1071
    %1073 = vmatpush1.msra.mxu0 %v1072
    %1074 = vmatprep.subr.mxu0 0.0
    %v1075 = vand.u32 %v784, 4294901760
    %v1076 = vsub.f32 %v784, %v1075
    %1077 = vmatpush1.msra.mxu0 %v1076
    %1078 = vmatprep.subr.mxu0 0.0
    %v1079 = vand.u32 %v785, 4294901760
    %v1080 = vsub.f32 %v785, %v1079
    %1081 = vmatpush1.msra.mxu0 %v1080
    %1082 = vmatprep.subr.mxu0 0.0
    %v1083 = vand.u32 %v786, 4294901760
    %v1084 = vsub.f32 %v786, %v1083
    %1085 = vmatpush1.msra.mxu0 %v1084
    %1086 = vmatprep.subr.mxu0 0.0
    %v1087 = vand.u32 %v787, 4294901760
    %v1088 = vsub.f32 %v787, %v1087
    %1089 = vmatpush1.msra.mxu0 %v1088
    %1090 = vmatprep.subr.mxu0 0.0
    %v1091 = vand.u32 %v788, 4294901760
    %v1092 = vsub.f32 %v788, %v1091
    %1093 = vmatpush1.msra.mxu0 %v1092
    %1094 = vmatprep.subr.mxu0 0.0
    %v1095 = vand.u32 %v789, 4294901760
    %v1096 = vsub.f32 %v789, %v1095
    %1097 = vmatpush1.msra.mxu0 %v1096
    %1098 = vmatprep.subr.mxu0 0.0
    %v1099 = vand.u32 %v790, 4294901760
    %v1100 = vsub.f32 %v790, %v1099
    %1101 = vmatpush1.msra.mxu0 %v1100
    %1102 = vmatprep.subr.mxu0 0.0
    %v1103 = vand.u32 %v791, 4294901760
    %v1104 = vsub.f32 %v791, %v1103
    %1105 = vmatpush1.msra.mxu0 %v1104
    %1106 = vmatprep.subr.mxu0 0.0
    %v1107 = vand.u32 %v792, 4294901760
    %v1108 = vsub.f32 %v792, %v1107
    %1109 = vmatpush1.msra.mxu0 %v1108
    %1110 = vmatprep.subr.mxu0 0.0
    %v1111 = vand.u32 %v793, 4294901760
    %v1112 = vsub.f32 %v793, %v1111
    %1113 = vmatpush1.msra.mxu0 %v1112
    %1114 = vmatprep.subr.mxu0 0.0
    %v1115 = vand.u32 %v794, 4294901760
    %v1116 = vsub.f32 %v794, %v1115
    %1117 = vmatpush1.msra.mxu0 %v1116
    %1118 = vmatprep.subr.mxu0 0.0
    %v1119 = vand.u32 %v795, 4294901760
    %v1120 = vsub.f32 %v795, %v1119
    %1121 = vmatpush1.msra.mxu0 %v1120
    %1122 = vmatprep.subr.mxu0 0.0
    %v1123 = vand.u32 %v796, 4294901760
    %v1124 = vsub.f32 %v796, %v1123
    %1125 = vmatpush1.msra.mxu0 %v1124
    %1126 = vmatprep.subr.mxu0 0.0
    %1127 = vmatpush1.msra.mxu0 0.0
    %1128 = vmatprep.subr.mxu0 0.0
    %1129 = vmatpush1.msra.mxu0 0.0
    %1130 = vmatprep.subr.mxu0 0.0
    %1131 = vmatpush1.msra.mxu0 0.0
    %1132 = vmatprep.subr.mxu0 0.0
    %1133 = vmatpush1.msra.mxu0 0.0
    %1134 = vmatprep.subr.mxu0 0.0
    %1135 = vmatpush1.msra.mxu0 0.0
    %1136 = vmatprep.subr.mxu0 0.0
    %1137 = vmatpush1.msra.mxu0 0.0
    %1138 = vmatprep.subr.mxu0 0.0
    %1139 = vmatpush1.msra.mxu0 0.0
    %1140 = vmatprep.subr.mxu0 0.0
    %1141 = vmatpush1.msra.mxu0 0.0
    %1142 = vmatprep.subr.mxu0 0.0
    %1143 = vmatpush1.msra.mxu0 0.0
    %1144 = vmatprep.subr.mxu0 0.0
    %1145 = vmatpush1.msra.mxu0 0.0
    %1146 = vmatprep.subr.mxu0 0.0
    %1147 = vmatpush1.msra.mxu0 0.0
    %1148 = vmatprep.subr.mxu0 0.0
    %1149 = vmatpush1.msra.mxu0 0.0
    %1150 = vmatprep.subr.mxu0 0.0
    %1151 = vmatpush1.msra.mxu0 0.0
    %1152 = vmatprep.subr.mxu0 0.0
    %1153 = vmatpush1.msra.mxu0 0.0
    %1154 = vmatprep.subr.mxu0 0.0
    %1155 = vmatpush1.msra.mxu0 0.0
    %1156 = vmatprep.subr.mxu0 0.0
    %1157 = vmatpush1.msra.mxu0 0.0
    %1158 = vmatprep.mubr.f32.mxu0 0.0
    %v1159 = vand.u32 %v779, 4294901760
    %v1160 = vsub.f32 %v779, %v1159
    %1161 = vmatmul.mubr.f32.gmra.mrb[0].mxu0 %v1160
    %v1162 = vpop.f32.mrb[0].mxu0
    %v1163 = vadd.f32 %v1053, %v1162
    %v1164 = vpop.f32.mrb[0].mxu0
    %1165 = vmatprep.mubr.f32.mxu0 0.0
    %v1166 = vand.u32 %v780, 4294901760
    %v1167 = vsub.f32 %v780, %v1166
    %1168 = vmatmul.mubr.f32.gmra.mrb[0].mxu0 %v1167
    %v1169 = vpop.f32.mrb[0].mxu0
    %v1170 = vadd.f32 %v1059, %v1169
    %v1171 = vpop.f32.mrb[0].mxu0
    %1172 = vdwg.mxu0
    %1173 = vmatprep.subr.mxu0 0.0
    %v1174 = vand.u32 %v781, 4294901760
    %1175 = vmatpush1.msra.mxu0 %v1174
    %1176 = vmatprep.subr.mxu0 0.0
    %v1177 = vand.u32 %v782, 4294901760
    %1178 = vmatpush1.msra.mxu0 %v1177
    %1179 = vmatprep.subr.mxu0 0.0
    %v1180 = vand.u32 %v783, 4294901760
    %1181 = vmatpush1.msra.mxu0 %v1180
    %1182 = vmatprep.subr.mxu0 0.0
    %v1183 = vand.u32 %v784, 4294901760
    %1184 = vmatpush1.msra.mxu0 %v1183
    %1185 = vmatprep.subr.mxu0 0.0
    %v1186 = vand.u32 %v785, 4294901760
    %1187 = vmatpush1.msra.mxu0 %v1186
    %1188 = vmatprep.subr.mxu0 0.0
    %v1189 = vand.u32 %v786, 4294901760
    %1190 = vmatpush1.msra.mxu0 %v1189
    %1191 = vmatprep.subr.mxu0 0.0
    %v1192 = vand.u32 %v787, 4294901760
    %1193 = vmatpush1.msra.mxu0 %v1192
    %1194 = vmatprep.subr.mxu0 0.0
    %v1195 = vand.u32 %v788, 4294901760
    %1196 = vmatpush1.msra.mxu0 %v1195
    %1197 = vmatprep.subr.mxu0 0.0
    %v1198 = vand.u32 %v789, 4294901760
    %1199 = vmatpush1.msra.mxu0 %v1198
    %1200 = vmatprep.subr.mxu0 0.0
    %v1201 = vand.u32 %v790, 4294901760
    %1202 = vmatpush1.msra.mxu0 %v1201
    %1203 = vmatprep.subr.mxu0 0.0
    %v1204 = vand.u32 %v791, 4294901760
    %1205 = vmatpush1.msra.mxu0 %v1204
    %1206 = vmatprep.subr.mxu0 0.0
    %v1207 = vand.u32 %v792, 4294901760
    %1208 = vmatpush1.msra.mxu0 %v1207
    %1209 = vmatprep.subr.mxu0 0.0
    %v1210 = vand.u32 %v793, 4294901760
    %1211 = vmatpush1.msra.mxu0 %v1210
    %1212 = vmatprep.subr.mxu0 0.0
    %v1213 = vand.u32 %v794, 4294901760
    %1214 = vmatpush1.msra.mxu0 %v1213
    %1215 = vmatprep.subr.mxu0 0.0
    %v1216 = vand.u32 %v795, 4294901760
    %1217 = vmatpush1.msra.mxu0 %v1216
    %1218 = vmatprep.subr.mxu0 0.0
    %v1219 = vand.u32 %v796, 4294901760
    %1220 = vmatpush1.msra.mxu0 %v1219
    %1221 = vmatprep.subr.mxu0 0.0
    %1222 = vmatpush1.msra.mxu0 0.0
    %1223 = vmatprep.subr.mxu0 0.0
    %1224 = vmatpush1.msra.mxu0 0.0
    %1225 = vmatprep.subr.mxu0 0.0
    %1226 = vmatpush1.msra.mxu0 0.0
    %1227 = vmatprep.subr.mxu0 0.0
    %1228 = vmatpush1.msra.mxu0 0.0
    %1229 = vmatprep.subr.mxu0 0.0
    %1230 = vmatpush1.msra.mxu0 0.0
    %1231 = vmatprep.subr.mxu0 0.0
    %1232 = vmatpush1.msra.mxu0 0.0
    %1233 = vmatprep.subr.mxu0 0.0
    %1234 = vmatpush1.msra.mxu0 0.0
    %1235 = vmatprep.subr.mxu0 0.0
    %1236 = vmatpush1.msra.mxu0 0.0
    %1237 = vmatprep.subr.mxu0 0.0
    %1238 = vmatpush1.msra.mxu0 0.0
    %1239 = vmatprep.subr.mxu0 0.0
    %1240 = vmatpush1.msra.mxu0 0.0
    %1241 = vmatprep.subr.mxu0 0.0
    %1242 = vmatpush1.msra.mxu0 0.0
    %1243 = vmatprep.subr.mxu0 0.0
    %1244 = vmatpush1.msra.mxu0 0.0
    %1245 = vmatprep.subr.mxu0 0.0
    %1246 = vmatpush1.msra.mxu0 0.0
    %1247 = vmatprep.subr.mxu0 0.0
    %1248 = vmatpush1.msra.mxu0 0.0
    %1249 = vmatprep.subr.mxu0 0.0
    %1250 = vmatpush1.msra.mxu0 0.0
    %1251 = vmatprep.subr.mxu0 0.0
    %1252 = vmatpush1.msra.mxu0 0.0
    %1253 = vmatprep.mubr.f32.mxu0 0.0
    %v1254 = vand.u32 %v779, 4294901760
    %v1255 = vsub.f32 %v779, %v1254
    %v1256 = vand.u32 %v1255, 4294901760
    %1257 = vmatmul.mubr.f32.gmra.mrb[0].mxu0 %v1256
    %v1258 = vpop.f32.mrb[0].mxu0
    %v1259 = vadd.f32 %v1163, %v1258
    %v1260 = vpop.f32.mrb[0].mxu0
    %1261 = vmatprep.mubr.f32.mxu0 0.0
    %v1262 = vand.u32 %v780, 4294901760
    %v1263 = vsub.f32 %v780, %v1262
    %v1264 = vand.u32 %v1263, 4294901760
    %1265 = vmatmul.mubr.f32.gmra.mrb[0].mxu0 %v1264
    %v1266 = vpop.f32.mrb[0].mxu0
    %v1267 = vadd.f32 %v1170, %v1266
    %v1268 = vpop.f32.mrb[0].mxu0
    %1269 = vdwg.mxu0
    %1270 = vmatprep.subr.mxu0 0.0
    %v1271 = vand.u32 %v781, 4294901760
    %v1272 = vsub.f32 %v781, %v1271
    %v1273 = vand.u32 %v1272, 4294901760
    %1274 = vmatpush1.msra.mxu0 %v1273
    %1275 = vmatprep.subr.mxu0 0.0
    %v1276 = vand.u32 %v782, 4294901760
    %v1277 = vsub.f32 %v782, %v1276
    %v1278 = vand.u32 %v1277, 4294901760
    %1279 = vmatpush1.msra.mxu0 %v1278
    %1280 = vmatprep.subr.mxu0 0.0
    %v1281 = vand.u32 %v783, 4294901760
    %v1282 = vsub.f32 %v783, %v1281
    %v1283 = vand.u32 %v1282, 4294901760
    %1284 = vmatpush1.msra.mxu0 %v1283
    %1285 = vmatprep.subr.mxu0 0.0
    %v1286 = vand.u32 %v784, 4294901760
    %v1287 = vsub.f32 %v784, %v1286
    %v1288 = vand.u32 %v1287, 4294901760
    %1289 = vmatpush1.msra.mxu0 %v1288
    %1290 = vmatprep.subr.mxu0 0.0
    %v1291 = vand.u32 %v785, 4294901760
    %v1292 = vsub.f32 %v785, %v1291
    %v1293 = vand.u32 %v1292, 4294901760
    %1294 = vmatpush1.msra.mxu0 %v1293
    %1295 = vmatprep.subr.mxu0 0.0
    %v1296 = vand.u32 %v786, 4294901760
    %v1297 = vsub.f32 %v786, %v1296
    %v1298 = vand.u32 %v1297, 4294901760
    %1299 = vmatpush1.msra.mxu0 %v1298
    %1300 = vmatprep.subr.mxu0 0.0
    %v1301 = vand.u32 %v787, 4294901760
    %v1302 = vsub.f32 %v787, %v1301
    %v1303 = vand.u32 %v1302, 4294901760
    %1304 = vmatpush1.msra.mxu0 %v1303
    %1305 = vmatprep.subr.mxu0 0.0
    %v1306 = vand.u32 %v788, 4294901760
    %v1307 = vsub.f32 %v788, %v1306
    %v1308 = vand.u32 %v1307, 4294901760
    %1309 = vmatpush1.msra.mxu0 %v1308
    %1310 = vmatprep.subr.mxu0 0.0
    %v1311 = vand.u32 %v789, 4294901760
    %v1312 = vsub.f32 %v789, %v1311
    %v1313 = vand.u32 %v1312, 4294901760
    %1314 = vmatpush1.msra.mxu0 %v1313
    %1315 = vmatprep.subr.mxu0 0.0
    %v1316 = vand.u32 %v790, 4294901760
    %v1317 = vsub.f32 %v790, %v1316
    %v1318 = vand.u32 %v1317, 4294901760
    %1319 = vmatpush1.msra.mxu0 %v1318
    %1320 = vmatprep.subr.mxu0 0.0
    %v1321 = vand.u32 %v791, 4294901760
    %v1322 = vsub.f32 %v791, %v1321
    %v1323 = vand.u32 %v1322, 4294901760
    %1324 = vmatpush1.msra.mxu0 %v1323
    %1325 = vmatprep.subr.mxu0 0.0
    %v1326 = vand.u32 %v792, 4294901760
    %v1327 = vsub.f32 %v792, %v1326
    %v1328 = vand.u32 %v1327, 4294901760
    %1329 = vmatpush1.msra.mxu0 %v1328
    %1330 = vmatprep.subr.mxu0 0.0
    %v1331 = vand.u32 %v793, 4294901760
    %v1332 = vsub.f32 %v793, %v1331
    %v1333 = vand.u32 %v1332, 4294901760
    %1334 = vmatpush1.msra.mxu0 %v1333
    %1335 = vmatprep.subr.mxu0 0.0
    %v1336 = vand.u32 %v794, 4294901760
    %v1337 = vsub.f32 %v794, %v1336
    %v1338 = vand.u32 %v1337, 4294901760
    %1339 = vmatpush1.msra.mxu0 %v1338
    %1340 = vmatprep.subr.mxu0 0.0
    %v1341 = vand.u32 %v795, 4294901760
    %v1342 = vsub.f32 %v795, %v1341
    %v1343 = vand.u32 %v1342, 4294901760
    %1344 = vmatpush1.msra.mxu0 %v1343
    %1345 = vmatprep.subr.mxu0 0.0
    %v1346 = vand.u32 %v796, 4294901760
    %v1347 = vsub.f32 %v796, %v1346
    %v1348 = vand.u32 %v1347, 4294901760
    %1349 = vmatpush1.msra.mxu0 %v1348
    %1350 = vmatprep.subr.mxu0 0.0
    %1351 = vmatpush1.msra.mxu0 0.0
    %1352 = vmatprep.subr.mxu0 0.0
    %1353 = vmatpush1.msra.mxu0 0.0
    %1354 = vmatprep.subr.mxu0 0.0
    %1355 = vmatpush1.msra.mxu0 0.0
    %1356 = vmatprep.subr.mxu0 0.0
    %1357 = vmatpush1.msra.mxu0 0.0
    %1358 = vmatprep.subr.mxu0 0.0
    %1359 = vmatpush1.msra.mxu0 0.0
    %1360 = vmatprep.subr.mxu0 0.0
    %1361 = vmatpush1.msra.mxu0 0.0
    %1362 = vmatprep.subr.mxu0 0.0
    %1363 = vmatpush1.msra.mxu0 0.0
    %1364 = vmatprep.subr.mxu0 0.0
    %1365 = vmatpush1.msra.mxu0 0.0
    %1366 = vmatprep.subr.mxu0 0.0
    %1367 = vmatpush1.msra.mxu0 0.0
    %1368 = vmatprep.subr.mxu0 0.0
    %1369 = vmatpush1.msra.mxu0 0.0
    %1370 = vmatprep.subr.mxu0 0.0
    %1371 = vmatpush1.msra.mxu0 0.0
    %1372 = vmatprep.subr.mxu0 0.0
    %1373 = vmatpush1.msra.mxu0 0.0
    %1374 = vmatprep.subr.mxu0 0.0
    %1375 = vmatpush1.msra.mxu0 0.0
    %1376 = vmatprep.subr.mxu0 0.0
    %1377 = vmatpush1.msra.mxu0 0.0
    %1378 = vmatprep.subr.mxu0 0.0
    %1379 = vmatpush1.msra.mxu0 0.0
    %1380 = vmatprep.subr.mxu0 0.0
    %1381 = vmatpush1.msra.mxu0 0.0
    %1382 = vmatprep.mubr.f32.mxu0 0.0
    %v1383 = vand.u32 %v779, 4294901760
    %1384 = vmatmul.mubr.f32.gmra.mrb[0].mxu0 %v1383
    %v1385 = vpop.f32.mrb[0].mxu0
    %v1386 = vadd.f32 %v1259, %v1385
    %v1387 = vpop.f32.mrb[0].mxu0
    %1388 = vmatprep.mubr.f32.mxu0 0.0
    %v1389 = vand.u32 %v780, 4294901760
    %1390 = vmatmul.mubr.f32.gmra.mrb[0].mxu0 %v1389
    %v1391 = vpop.f32.mrb[0].mxu0
    %v1392 = vadd.f32 %v1267, %v1391
    %v1393 = vpop.f32.mrb[0].mxu0
    %1394 = vdwg.mxu0
    %1395 = vmatprep.subr.mxu0 0.0
    %v1396 = vand.u32 %v781, 4294901760
    %1397 = vmatpush1.msra.mxu0 %v1396
    %1398 = vmatprep.subr.mxu0 0.0
    %v1399 = vand.u32 %v782, 4294901760
    %1400 = vmatpush1.msra.mxu0 %v1399
    %1401 = vmatprep.subr.mxu0 0.0
    %v1402 = vand.u32 %v783, 4294901760
    %1403 = vmatpush1.msra.mxu0 %v1402
    %1404 = vmatprep.subr.mxu0 0.0
    %v1405 = vand.u32 %v784, 4294901760
    %1406 = vmatpush1.msra.mxu0 %v1405
    %1407 = vmatprep.subr.mxu0 0.0
    %v1408 = vand.u32 %v785, 4294901760
    %1409 = vmatpush1.msra.mxu0 %v1408
    %1410 = vmatprep.subr.mxu0 0.0
    %v1411 = vand.u32 %v786, 4294901760
    %1412 = vmatpush1.msra.mxu0 %v1411
    %1413 = vmatprep.subr.mxu0 0.0
    %v1414 = vand.u32 %v787, 4294901760
    %1415 = vmatpush1.msra.mxu0 %v1414
    %1416 = vmatprep.subr.mxu0 0.0
    %v1417 = vand.u32 %v788, 4294901760
    %1418 = vmatpush1.msra.mxu0 %v1417
    %1419 = vmatprep.subr.mxu0 0.0
    %v1420 = vand.u32 %v789, 4294901760
    %1421 = vmatpush1.msra.mxu0 %v1420
    %1422 = vmatprep.subr.mxu0 0.0
    %v1423 = vand.u32 %v790, 4294901760
    %1424 = vmatpush1.msra.mxu0 %v1423
    %1425 = vmatprep.subr.mxu0 0.0
    %v1426 = vand.u32 %v791, 4294901760
    %1427 = vmatpush1.msra.mxu0 %v1426
    %1428 = vmatprep.subr.mxu0 0.0
    %v1429 = vand.u32 %v792, 4294901760
    %1430 = vmatpush1.msra.mxu0 %v1429
    %1431 = vmatprep.subr.mxu0 0.0
    %v1432 = vand.u32 %v793, 4294901760
    %1433 = vmatpush1.msra.mxu0 %v1432
    %1434 = vmatprep.subr.mxu0 0.0
    %v1435 = vand.u32 %v794, 4294901760
    %1436 = vmatpush1.msra.mxu0 %v1435
    %1437 = vmatprep.subr.mxu0 0.0
    %v1438 = vand.u32 %v795, 4294901760
    %1439 = vmatpush1.msra.mxu0 %v1438
    %1440 = vmatprep.subr.mxu0 0.0
    %v1441 = vand.u32 %v796, 4294901760
    %1442 = vmatpush1.msra.mxu0 %v1441
    %1443 = vmatprep.subr.mxu0 0.0
    %1444 = vmatpush1.msra.mxu0 0.0
    %1445 = vmatprep.subr.mxu0 0.0
    %1446 = vmatpush1.msra.mxu0 0.0
    %1447 = vmatprep.subr.mxu0 0.0
    %1448 = vmatpush1.msra.mxu0 0.0
    %1449 = vmatprep.subr.mxu0 0.0
    %1450 = vmatpush1.msra.mxu0 0.0
    %1451 = vmatprep.subr.mxu0 0.0
    %1452 = vmatpush1.msra.mxu0 0.0
    %1453 = vmatprep.subr.mxu0 0.0
    %1454 = vmatpush1.msra.mxu0 0.0
    %1455 = vmatprep.subr.mxu0 0.0
    %1456 = vmatpush1.msra.mxu0 0.0
    %1457 = vmatprep.subr.mxu0 0.0
    %1458 = vmatpush1.msra.mxu0 0.0
    %1459 = vmatprep.subr.mxu0 0.0
    %1460 = vmatpush1.msra.mxu0 0.0
    %1461 = vmatprep.subr.mxu0 0.0
    %1462 = vmatpush1.msra.mxu0 0.0
    %1463 = vmatprep.subr.mxu0 0.0
    %1464 = vmatpush1.msra.mxu0 0.0
    %1465 = vmatprep.subr.mxu0 0.0
    %1466 = vmatpush1.msra.mxu0 0.0
    %1467 = vmatprep.subr.mxu0 0.0
    %1468 = vmatpush1.msra.mxu0 0.0
    %1469 = vmatprep.subr.mxu0 0.0
    %1470 = vmatpush1.msra.mxu0 0.0
    %1471 = vmatprep.subr.mxu0 0.0
    %1472 = vmatpush1.msra.mxu0 0.0
    %1473 = vmatprep.subr.mxu0 0.0
    %1474 = vmatpush1.msra.mxu0 0.0
    %1475 = vmatprep.mubr.f32.mxu0 0.0
    %v1476 = vand.u32 %v779, 4294901760
    %1477 = vmatmul.mubr.f32.gmra.mrb[0].mxu0 %v1476
    %v1478 = vpop.f32.mrb[0].mxu0
    %v1479 = vadd.f32 %v1386, %v1478
    %v1480 = vpop.f32.mrb[0].mxu0
    %1481 = vmatprep.mubr.f32.mxu0 0.0
    %v1482 = vand.u32 %v780, 4294901760
    %1483 = vmatmul.mubr.f32.gmra.mrb[0].mxu0 %v1482
    %v1484 = vpop.f32.mrb[0].mxu0
    %v1485 = vadd.f32 %v1392, %v1484
    %v1486 = vpop.f32.mrb[0].mxu0
    %1487 = vdwg.mxu0
    %1488 = vst [vmem:[#allocation8] sm:$0xff] %v1479
    %1489 = vst [vmem:[#allocation8 + $0x8] sm:$0xff] %v1485
    // Predicated region
    $region34: #{tpu_custom_call.1} parent=1 // pred_check
      _
    $region35: #{tpu_custom_call.1} parent=1 // pred_check_branch
      %1491 = sbr.rel (0) target = $region37
    $region36: #{tpu_custom_call.1} parent=1 // pred_region
      %s1493 = ssub.s32 256, 256
      %1494 = vsyncadd [#allocation4], %s1493
      %s1495 = sshll.u32 [#allocation8], 4
      %s1496 = int_to_ptr.vmem [resolvable:$true] %s1495
      %1501 = dma.vmem_to_hbm [thread:$0]  %s1496, 256, %s5, [#allocation4], 128, 128, 8
    $region37: #{tpu_custom_call.1} parent=1 // pred_fallthru
      _
    // Predicated region
    $region38: #{tpu_custom_call.1} parent=1 // pred_check
      _
    $region39: #{tpu_custom_call.1} parent=1 // pred_check_branch
      %1503 = sbr.rel (0) target = $region41
    $region40: #{tpu_custom_call.1} parent=1 // pred_region
      %1504 = dma.done [#allocation4], 256
    $region41: #{tpu_custom_call.1} parent=1 // pred_fallthru
      _
    %1505 = vsyncpa [#allocation3], 1
    %1506 = vsyncpa [#allocation6], 1
    %1507 = vsyncpa [#allocation4], 1

</llo_original>
